<compile_context>
chip_gen: v6e
topology: v6e:2x2x1
jax: 0.10.0
libtpu: 0.0.40
codegen_flags: <defaults>
</compile_context>

<pallas_src>
import functools
import math

import jax
import jax.numpy as jnp
from jax.experimental import pallas as pl
from jax.experimental.pallas import tpu as pltpu

# --- model hyperparameters (module-level globals in the reference code) ---
d_model = 32
n_head = 4
d_k = 8
d_v = 8

_INV_SQRT_DK = 1.0 / math.sqrt(d_k)
_MASK_NEG = -1e30  # large finite negative instead of -inf (no NaN on fully-masked rows)


# ------------------------------ fused MHA kernel ------------------------------

def _mha_core(q_ref, k_ref, v_ref, mask_ref,
              wq_ref, bq_ref, wk_ref, bk_ref, wv_ref, bv_ref,
              wo_ref, bo_ref,
              out_ref, attn_ref, av_ref, *, compute_dtype):
    """Fully fused multi-head attention for one batch element.

    q_ref: [T, d_model]   k_ref/v_ref: [S, d_model]   mask_ref: [T, S] int8 (non-zero = masked)
    weights: pre-transposed [d_in, d_out] in compute_dtype; biases: [1, d_out] f32
    out_ref: [T, d_model]   attn_ref: [n_head, T, S] or None   av_ref: VMEM [T, n_head*d_v] f32
    """
    cdt = compute_dtype
    f32 = jnp.float32

    # ---- input projections; 1/sqrt(d_k) folded once into q2 ----
    q2 = (jnp.dot(q_ref[...].astype(cdt), wq_ref[...], preferred_element_type=f32)
          + bq_ref[...]) * _INV_SQRT_DK
    k2 = jnp.dot(k_ref[...].astype(cdt), wk_ref[...], preferred_element_type=f32) + bk_ref[...]
    v2 = jnp.dot(v_ref[...].astype(cdt), wv_ref[...], preferred_element_type=f32) + bv_ref[...]

    # Additive mask bias computed once and reused by every head.
    neg_bias = mask_ref[...].astype(f32) * _MASK_NEG          # [T, S]

    # Static unroll over heads (n_head = 4 is tiny).
    # TODO(synk): for large tiles use lax.fori_loop(unroll=True) / a head grid axis to
    # bound live ranges, and tile src flash-style for v7x's 64 MiB VMEM.
    for h in range(n_head):
        qh = q2[:, h * d_k:(h + 1) * d_k].astype(cdt)         # [T, d_k]
        kh = k2[:, h * d_k:(h + 1) * d_k].astype(cdt)         # [S, d_k]
        vh = v2[:, h * d_v:(h + 1) * d_v].astype(cdt)         # [S, d_v]

        # scores = q @ k^T : contract last dims directly (no in-kernel transpose)
        scores = jax.lax.dot_general(
            qh, kh, (((1,), (1,)), ((), ())),
            preferred_element_type=f32) + neg_bias            # [T, S]

        # softmax over src axis, f32 throughout; divide goes to the EUP slot.
        m = jnp.max(scores, axis=-1, keepdims=True)
        e = jnp.exp(scores - m)
        s = jnp.sum(e, axis=-1, keepdims=True)
        attn = e * pl.reciprocal(s, approx=True)              # [T, S]

        if attn_ref is not None:
            attn_ref[h, :, :] = attn.astype(attn_ref.dtype)

        # Write AV straight into the VMEM slab (no list + concatenate relayout).
        av_ref[:, h * d_v:(h + 1) * d_v] = jnp.dot(
            attn.astype(cdt), vh, preferred_element_type=f32)

    # ---- output projection from the slab ----
    out = jnp.dot(av_ref[...].astype(cdt), wo_ref[...],
                  preferred_element_type=f32) + bo_ref[...]
    out_ref[...] = out.astype(out_ref.dtype)


def _mha_kernel_with_attn(q_ref, k_ref, v_ref, mask_ref,
                          wq_ref, bq_ref, wk_ref, bk_ref, wv_ref, bv_ref,
                          wo_ref, bo_ref, out_ref, attn_ref, av_ref, *, compute_dtype):
    _mha_core(q_ref, k_ref, v_ref, mask_ref, wq_ref, bq_ref, wk_ref, bk_ref,
              wv_ref, bv_ref, wo_ref, bo_ref, out_ref, attn_ref, av_ref,
              compute_dtype=compute_dtype)


def _mha_kernel_no_attn(q_ref, k_ref, v_ref, mask_ref,
                        wq_ref, bq_ref, wk_ref, bk_ref, wv_ref, bv_ref,
                        wo_ref, bo_ref, out_ref, av_ref, *, compute_dtype):
    _mha_core(q_ref, k_ref, v_ref, mask_ref, wq_ref, bq_ref, wk_ref, bk_ref,
              wv_ref, bv_ref, wo_ref, bo_ref, out_ref, None, av_ref,
              compute_dtype=compute_dtype)


# ------------------------------ module wrapper --------------------------------

def init_params(key):
    """Deterministic nn.Linear-style init; weights stored pre-transposed [d_in, d_out]."""
    def lin(k, d_out, d_in):
        kw, kb = jax.random.split(k)
        bound = 1.0 / math.sqrt(d_in)
        w = jax.random.uniform(kw, (d_out, d_in), jnp.float32, -bound, bound)
        b = jax.random.uniform(kb, (1, d_out), jnp.float32, -bound, bound)
        return w.T, b                          # [d_in, d_out] so kernel never transposes

    k1, k2, k3, k4 = jax.random.split(key, 4)
    p = {}
    p["W_Q_w"], p["W_Q_b"] = lin(k1, n_head * d_k, d_model)
    p["W_K_w"], p["W_K_b"] = lin(k2, n_head * d_k, d_model)
    p["W_V_w"], p["W_V_b"] = lin(k3, n_head * d_v, d_model)
    p["lin_w"], p["lin_b"] = lin(k4, d_model, n_head * d_v)
    return p


def multi_head_attention(params, Q, K, V, attn_mask, *,
                         return_attn=True, compute_dtype=jnp.float32):
    """Q: [B, T, d_model], K/V: [B, S, d_model], attn_mask: [B, T, S] (bool/0-1).

    Returns (attn_value [B, T, d_model], attn [B, n_head, T, S] or None).
    compute_dtype=jnp.bfloat16 feeds the MXU bf16 operands (v6e/v7x); softmax stays f32.
    """
    batch, tgt_len, _ = Q.shape
    src_len = K.shape[1]
    cdt = compute_dtype

    # int8 mask: 4x fewer HBM bytes than f32 (biggest win on v5e's store/DMA path).
    mask_i8 = attn_mask.astype(jnp.int8)

    # Matmul weights in the compute dtype; biases stay f32 (added after f32 accumulate).
    wq = params["W_Q_w"].astype(cdt)
    wk = params["W_K_w"].astype(cdt)
    wv = params["W_V_w"].astype(cdt)
    wo = params["lin_w"].astype(cdt)
    bq, bk, bv, bo = params["W_Q_b"], params["W_K_b"], params["W_V_b"], params["lin_b"]

    def full(shape):
        # whole-array block, same tile every grid step
        return pl.BlockSpec(shape, lambda b, _n=len(shape): (0,) * _n)

    in_specs = [
        pl.BlockSpec((None, tgt_len, d_model), lambda b: (b, 0, 0)),
        pl.BlockSpec((None, src_len, d_model), lambda b: (b, 0, 0)),
        pl.BlockSpec((None, src_len, d_model), lambda b: (b, 0, 0)),
        pl.BlockSpec((None, tgt_len, src_len), lambda b: (b, 0, 0)),
        full((d_model, n_head * d_k)), full((1, n_head * d_k)),
        full((d_model, n_head * d_k)), full((1, n_head * d_k)),
        full((d_model, n_head * d_v)), full((1, n_head * d_v)),
        full((n_head * d_v, d_model)), full((1, d_model)),
    ]

    out_specs = [pl.BlockSpec((None, tgt_len, d_model), lambda b: (b, 0, 0))]
    out_shape = [jax.ShapeDtypeStruct((batch, tgt_len, d_model), jnp.float32)]
    if return_attn:
        # TODO(synk): at realistic sizes pad/tile so src_len (the lane dim of this
        # output) is a multiple of 128; at toy S=8 this store is a masked partial store.
        out_specs.append(pl.BlockSpec((None, n_head, tgt_len, src_len),
                                      lambda b: (b, 0, 0, 0)))
        out_shape.append(jax.ShapeDtypeStruct((batch, n_head, tgt_len, src_len),
                                              jnp.float32))
        kernel = functools.partial(_mha_kernel_with_attn, compute_dtype=cdt)
    else:
        kernel = functools.partial(_mha_kernel_no_attn, compute_dtype=cdt)

    outs = pl.pallas_call(
        kernel,
        grid=(batch,),
        in_specs=in_specs,
        out_specs=out_specs,
        out_shape=out_shape,
        scratch_shapes=[pltpu.VMEM((tgt_len, n_head * d_v), jnp.float32)],
        compiler_params=pltpu.CompilerParams(dimension_semantics=("parallel",)),
    )(Q, K, V, mask_i8, wq, bq, wk, bk, wv, bv, wo, bo)

    if return_attn:
        return outs[0], outs[1]
    return outs[0], None


# ------------------------------ pure-JAX reference ----------------------------

def _reference(params, Q, K, V, attn_mask):
    q = Q @ params["W_Q_w"] + params["W_Q_b"]
    k = K @ params["W_K_w"] + params["W_K_b"]
    v = V @ params["W_V_w"] + params["W_V_b"]
    B, T, _ = Q.shape
    S = K.shape[1]
    q = q.reshape(B, T, n_head, d_k).transpose(0, 2, 1, 3)
    k = k.reshape(B, S, n_head, d_k).transpose(0, 2, 1, 3)
    v = v.reshape(B, S, n_head, d_v).transpose(0, 2, 1, 3)
    scores = jnp.einsum("bhtd,bhsd->bhts", q, k) / math.sqrt(d_k)
    scores = jnp.where(attn_mask[:, None, :, :], _MASK_NEG, scores)
    attn = jax.nn.softmax(scores, axis=-1)
    av = jnp.einsum("bhts,bhsd->bhtd", attn, v)
    concat = av.transpose(0, 2, 1, 3).reshape(B, T, n_head * d_v)
    out = concat @ params["lin_w"] + params["lin_b"]
    return out, attn


# --------------------------------- demo ---------------------------------------

if __name__ == "__main__":
    key = jax.random.PRNGKey(0)
    kp, kq, kk, kv = jax.random.split(key, 4)

    batch, tgt_len, src_len = 2, 8, 8
    params = init_params(kp)

    Q = jax.random.normal(kq, (batch, tgt_len, d_model), jnp.float32)
    K = jax.random.normal(kk, (batch, src_len, d_model), jnp.float32)
    V = jax.random.normal(kv, (batch, src_len, d_model), jnp.float32)
    # causal mask: True above the diagonal (masked positions)
    attn_mask = jnp.broadcast_to(
        jnp.triu(jnp.ones((tgt_len, src_len), jnp.bool_), k=1)[None],
        (batch, tgt_len, src_len),
    )

    ref_out, ref_attn = _reference(params, Q, K, V, attn_mask)

    # 1) f32 compute path, with the attention-probabilities output.
    out_f32, attn_f32 = multi_head_attention(params, Q, K, V, attn_mask)
    jax.block_until_ready((out_f32, attn_f32))
    assert out_f32.shape == (batch, tgt_len, d_model)
    assert attn_f32.shape == (batch, n_head, tgt_len, src_len)
    assert jnp.allclose(out_f32, ref_out, rtol=1e-2, atol=1e-2)
    assert jnp.allclose(attn_f32, ref_attn, rtol=1e-2, atol=1e-2)

    # 2) attn-output dropped (removes the O(B*H*T*S) writeback).
    out_only, no_attn = multi_head_attention(params, Q, K, V, attn_mask, return_attn=False)
    jax.block_until_ready(out_only)
    assert no_attn is None
    assert jnp.allclose(out_only, ref_out, rtol=1e-2, atol=1e-2)

    # 3) bf16 MXU-operand path (v6e/v7x); softmax stays f32, so accuracy stays close.
    out_bf16, attn_bf16 = multi_head_attention(params, Q, K, V, attn_mask,
                                               compute_dtype=jnp.bfloat16)
    jax.block_until_ready((out_bf16, attn_bf16))
    assert jnp.allclose(out_bf16, ref_out, rtol=5e-2, atol=5e-2)
    assert jnp.allclose(attn_bf16, ref_attn, rtol=5e-2, atol=5e-2)

    print("KERNEL_OK")
</pallas_src>

<mosaic_0001>
module attributes {stable_mosaic.version = 11 : i64} {
  func.func @_mha_kernel_with_attn(%arg0: i32, %arg1: memref<1x8x32xf32, #tpu.memory_space<vmem>>, %arg2: memref<1x8x32xf32, #tpu.memory_space<vmem>>, %arg3: memref<1x8x32xf32, #tpu.memory_space<vmem>>, %arg4: memref<1x8x8xi8, #tpu.memory_space<vmem>>, %arg5: memref<32x32xf32, #tpu.memory_space<vmem>>, %arg6: memref<1x32xf32, #tpu.memory_space<vmem>>, %arg7: memref<32x32xf32, #tpu.memory_space<vmem>>, %arg8: memref<1x32xf32, #tpu.memory_space<vmem>>, %arg9: memref<32x32xf32, #tpu.memory_space<vmem>>, %arg10: memref<1x32xf32, #tpu.memory_space<vmem>>, %arg11: memref<32x32xf32, #tpu.memory_space<vmem>>, %arg12: memref<1x32xf32, #tpu.memory_space<vmem>>, %arg13: memref<1x8x32xf32, #tpu.memory_space<vmem>>, %arg14: memref<1x4x8x8xf32, #tpu.memory_space<vmem>>, %arg15: memref<8x32xf32, #tpu.memory_space<vmem>>) attributes {dimension_semantics = [#tpu.dimension_semantics<parallel>], iteration_bounds = array<i64: 2>, scalar_prefetch = 0 : i64, scratch_operands = 1 : i64, tpu.core_type = #tpu.core_type<tc>, window_params = [{transform_indices = @transform_0, window_bounds = array<i64: 1, 8, 32>}, {transform_indices = @transform_1, window_bounds = array<i64: 1, 8, 32>}, {transform_indices = @transform_2, window_bounds = array<i64: 1, 8, 32>}, {transform_indices = @transform_3, window_bounds = array<i64: 1, 8, 8>}, {pipeline_mode = #tpu.pipeline_mode<synchronous>, transform_indices = @transform_4, window_bounds = array<i64: 32, 32>}, {pipeline_mode = #tpu.pipeline_mode<synchronous>, transform_indices = @transform_5, window_bounds = array<i64: 1, 32>}, {pipeline_mode = #tpu.pipeline_mode<synchronous>, transform_indices = @transform_6, window_bounds = array<i64: 32, 32>}, {pipeline_mode = #tpu.pipeline_mode<synchronous>, transform_indices = @transform_7, window_bounds = array<i64: 1, 32>}, {pipeline_mode = #tpu.pipeline_mode<synchronous>, transform_indices = @transform_8, window_bounds = array<i64: 32, 32>}, {pipeline_mode = #tpu.pipeline_mode<synchronous>, transform_indices = @transform_9, window_bounds = array<i64: 1, 32>}, {pipeline_mode = #tpu.pipeline_mode<synchronous>, transform_indices = @transform_10, window_bounds = array<i64: 32, 32>}, {pipeline_mode = #tpu.pipeline_mode<synchronous>, transform_indices = @transform_11, window_bounds = array<i64: 1, 32>}, {transform_indices = @transform_12, window_bounds = array<i64: 1, 8, 32>}, {transform_indices = @transform_13, window_bounds = array<i64: 1, 4, 8, 8>}]} {
    %c0 = arith.constant 0 : index
    %c0_0 = arith.constant 0 : index
    %c0_1 = arith.constant 0 : index
    %0 = vector.load %arg1[%c0, %c0_0, %c0_1] : memref<1x8x32xf32, #tpu.memory_space<vmem>>, vector<1x8x32xf32>
    %1 = vector.shape_cast %0 : vector<1x8x32xf32> to vector<8x32xf32>
    %c0_2 = arith.constant 0 : index
    %c0_3 = arith.constant 0 : index
    %2 = vector.load %arg5[%c0_2, %c0_3] : memref<32x32xf32, #tpu.memory_space<vmem>>, vector<32x32xf32>
    %cst = arith.constant dense<0.000000e+00> : vector<8x32xf32>
    %3 = tpu.matmul %1, %2, %cst {dimension_numbers = #tpu.dot_dimension_numbers<[1], [0], [0], [1], [0, 0, 1, 1], [], []>} : vector<8x32xf32>, vector<32x32xf32>, vector<8x32xf32> -> vector<8x32xf32>
    %c0_4 = arith.constant 0 : index
    %c0_5 = arith.constant 0 : index
    %4 = vector.load %arg6[%c0_4, %c0_5] : memref<1x32xf32, #tpu.memory_space<vmem>>, vector<1x32xf32>
    %5 = vector.broadcast %4 : vector<1x32xf32> to vector<8x32xf32>
    %6 = arith.addf %3, %5 : vector<8x32xf32>
    %cst_6 = arith.constant 0.353553385 : f32
    %7 = vector.broadcast %cst_6 : f32 to vector<8x32xf32>
    %8 = arith.mulf %6, %7 : vector<8x32xf32>
    %c0_7 = arith.constant 0 : index
    %c0_8 = arith.constant 0 : index
    %c0_9 = arith.constant 0 : index
    %9 = vector.load %arg2[%c0_7, %c0_8, %c0_9] : memref<1x8x32xf32, #tpu.memory_space<vmem>>, vector<1x8x32xf32>
    %10 = vector.shape_cast %9 : vector<1x8x32xf32> to vector<8x32xf32>
    %c0_10 = arith.constant 0 : index
    %c0_11 = arith.constant 0 : index
    %11 = vector.load %arg7[%c0_10, %c0_11] : memref<32x32xf32, #tpu.memory_space<vmem>>, vector<32x32xf32>
    %cst_12 = arith.constant dense<0.000000e+00> : vector<8x32xf32>
    %12 = tpu.matmul %10, %11, %cst_12 {dimension_numbers = #tpu.dot_dimension_numbers<[1], [0], [0], [1], [0, 0, 1, 1], [], []>} : vector<8x32xf32>, vector<32x32xf32>, vector<8x32xf32> -> vector<8x32xf32>
    %c0_13 = arith.constant 0 : index
    %c0_14 = arith.constant 0 : index
    %13 = vector.load %arg8[%c0_13, %c0_14] : memref<1x32xf32, #tpu.memory_space<vmem>>, vector<1x32xf32>
    %14 = vector.broadcast %13 : vector<1x32xf32> to vector<8x32xf32>
    %15 = arith.addf %12, %14 : vector<8x32xf32>
    %c0_15 = arith.constant 0 : index
    %c0_16 = arith.constant 0 : index
    %c0_17 = arith.constant 0 : index
    %16 = vector.load %arg3[%c0_15, %c0_16, %c0_17] : memref<1x8x32xf32, #tpu.memory_space<vmem>>, vector<1x8x32xf32>
    %17 = vector.shape_cast %16 : vector<1x8x32xf32> to vector<8x32xf32>
    %c0_18 = arith.constant 0 : index
    %c0_19 = arith.constant 0 : index
    %18 = vector.load %arg9[%c0_18, %c0_19] : memref<32x32xf32, #tpu.memory_space<vmem>>, vector<32x32xf32>
    %cst_20 = arith.constant dense<0.000000e+00> : vector<8x32xf32>
    %19 = tpu.matmul %17, %18, %cst_20 {dimension_numbers = #tpu.dot_dimension_numbers<[1], [0], [0], [1], [0, 0, 1, 1], [], []>} : vector<8x32xf32>, vector<32x32xf32>, vector<8x32xf32> -> vector<8x32xf32>
    %c0_21 = arith.constant 0 : index
    %c0_22 = arith.constant 0 : index
    %20 = vector.load %arg10[%c0_21, %c0_22] : memref<1x32xf32, #tpu.memory_space<vmem>>, vector<1x32xf32>
    %21 = vector.broadcast %20 : vector<1x32xf32> to vector<8x32xf32>
    %22 = arith.addf %19, %21 : vector<8x32xf32>
    %c0_23 = arith.constant 0 : index
    %c0_24 = arith.constant 0 : index
    %c0_25 = arith.constant 0 : index
    %23 = vector.load %arg4[%c0_23, %c0_24, %c0_25] : memref<1x8x8xi8, #tpu.memory_space<vmem>>, vector<1x8x8xi8>
    %24 = vector.shape_cast %23 : vector<1x8x8xi8> to vector<8x8xi8>
    %25 = arith.sitofp %24 : vector<8x8xi8> to vector<8x8xf32>
    %cst_26 = arith.constant -1.000000e+30 : f32
    %26 = vector.broadcast %cst_26 : f32 to vector<8x8xf32>
    %27 = arith.mulf %25, %26 : vector<8x8xf32>
    %28 = vector.extract_strided_slice %8 {offsets = [0, 0], sizes = [8, 8], strides = [1, 1]} : vector<8x32xf32> to vector<8x8xf32>
    %29 = vector.extract_strided_slice %15 {offsets = [0, 0], sizes = [8, 8], strides = [1, 1]} : vector<8x32xf32> to vector<8x8xf32>
    %30 = vector.extract_strided_slice %22 {offsets = [0, 0], sizes = [8, 8], strides = [1, 1]} : vector<8x32xf32> to vector<8x8xf32>
    %cst_27 = arith.constant dense<0.000000e+00> : vector<8x8xf32>
    %31 = tpu.matmul %28, %29, %cst_27 {dimension_numbers = #tpu.dot_dimension_numbers<[1], [1], [0], [0], [0, 0, 1, 0], [], []>} : vector<8x8xf32>, vector<8x8xf32>, vector<8x8xf32> -> vector<8x8xf32>
    %32 = arith.addf %31, %27 : vector<8x8xf32>
    %cst_28 = arith.constant dense<0xFF800000> : vector<8xf32>
    %33 = vector.multi_reduction <maximumf>, %32, %cst_28 [1] : vector<8x8xf32> to vector<8xf32>
    %34 = vector.shape_cast %33 : vector<8xf32> to vector<8x1xf32>
    %35 = vector.broadcast %34 : vector<8x1xf32> to vector<8x8xf32>
    %36 = arith.subf %32, %35 : vector<8x8xf32>
    %37 = math.exp %36 : vector<8x8xf32>
    %cst_29 = arith.constant dense<0.000000e+00> : vector<8xf32>
    %38 = vector.multi_reduction <add>, %37, %cst_29 [1] : vector<8x8xf32> to vector<8xf32>
    %39 = vector.shape_cast %38 : vector<8xf32> to vector<8x1xf32>
    %40 = tpu.reciprocal %39 {approx = true} : vector<8x1xf32> -> vector<8x1xf32>
    %41 = vector.broadcast %40 : vector<8x1xf32> to vector<8x8xf32>
    %42 = arith.mulf %37, %41 : vector<8x8xf32>
    %c0_30 = arith.constant 0 : index
    %c0_31 = arith.constant 0 : index
    %c0_32 = arith.constant 0 : index
    %c0_33 = arith.constant 0 : index
    %43 = vector.load %arg14[%c0_30, %c0_31, %c0_32, %c0_33] : memref<1x4x8x8xf32, #tpu.memory_space<vmem>>, vector<1x1x8x8xf32>
    %44 = vector.shape_cast %43 : vector<1x1x8x8xf32> to vector<8x8xf32>
    %45 = vector.shape_cast %42 : vector<8x8xf32> to vector<1x1x8x8xf32>
    tpu.vector_store %arg14[%c0_30, %c0_31, %c0_32, %c0_33], %45 {strides = array<i32>} : memref<1x4x8x8xf32, #tpu.memory_space<vmem>>, vector<1x1x8x8xf32>,
    %cst_34 = arith.constant dense<0.000000e+00> : vector<8x8xf32>
    %46 = tpu.matmul %42, %30, %cst_34 {dimension_numbers = #tpu.dot_dimension_numbers<[1], [0], [0], [1], [0, 0, 1, 1], [], []>} : vector<8x8xf32>, vector<8x8xf32>, vector<8x8xf32> -> vector<8x8xf32>
    %c0_35 = arith.constant 0 : index
    %c0_36 = arith.constant 0 : index
    %47 = vector.load %arg15[%c0_35, %c0_36] : memref<8x32xf32, #tpu.memory_space<vmem>>, vector<8x8xf32>
    tpu.vector_store %arg15[%c0_35, %c0_36], %46 {strides = array<i32>} : memref<8x32xf32, #tpu.memory_space<vmem>>, vector<8x8xf32>,
    %48 = vector.extract_strided_slice %8 {offsets = [0, 8], sizes = [8, 8], strides = [1, 1]} : vector<8x32xf32> to vector<8x8xf32>
    %49 = vector.extract_strided_slice %15 {offsets = [0, 8], sizes = [8, 8], strides = [1, 1]} : vector<8x32xf32> to vector<8x8xf32>
    %50 = vector.extract_strided_slice %22 {offsets = [0, 8], sizes = [8, 8], strides = [1, 1]} : vector<8x32xf32> to vector<8x8xf32>
    %cst_37 = arith.constant dense<0.000000e+00> : vector<8x8xf32>
    %51 = tpu.matmul %48, %49, %cst_37 {dimension_numbers = #tpu.dot_dimension_numbers<[1], [1], [0], [0], [0, 0, 1, 0], [], []>} : vector<8x8xf32>, vector<8x8xf32>, vector<8x8xf32> -> vector<8x8xf32>
    %52 = arith.addf %51, %27 : vector<8x8xf32>
    %cst_38 = arith.constant dense<0xFF800000> : vector<8xf32>
    %53 = vector.multi_reduction <maximumf>, %52, %cst_38 [1] : vector<8x8xf32> to vector<8xf32>
    %54 = vector.shape_cast %53 : vector<8xf32> to vector<8x1xf32>
    %55 = vector.broadcast %54 : vector<8x1xf32> to vector<8x8xf32>
    %56 = arith.subf %52, %55 : vector<8x8xf32>
    %57 = math.exp %56 : vector<8x8xf32>
    %cst_39 = arith.constant dense<0.000000e+00> : vector<8xf32>
    %58 = vector.multi_reduction <add>, %57, %cst_39 [1] : vector<8x8xf32> to vector<8xf32>
    %59 = vector.shape_cast %58 : vector<8xf32> to vector<8x1xf32>
    %60 = tpu.reciprocal %59 {approx = true} : vector<8x1xf32> -> vector<8x1xf32>
    %61 = vector.broadcast %60 : vector<8x1xf32> to vector<8x8xf32>
    %62 = arith.mulf %57, %61 : vector<8x8xf32>
    %c0_40 = arith.constant 0 : index
    %c1 = arith.constant 1 : index
    %c0_41 = arith.constant 0 : index
    %c0_42 = arith.constant 0 : index
    %63 = vector.load %arg14[%c0_40, %c1, %c0_41, %c0_42] : memref<1x4x8x8xf32, #tpu.memory_space<vmem>>, vector<1x1x8x8xf32>
    %64 = vector.shape_cast %63 : vector<1x1x8x8xf32> to vector<8x8xf32>
    %65 = vector.shape_cast %62 : vector<8x8xf32> to vector<1x1x8x8xf32>
    tpu.vector_store %arg14[%c0_40, %c1, %c0_41, %c0_42], %65 {strides = array<i32>} : memref<1x4x8x8xf32, #tpu.memory_space<vmem>>, vector<1x1x8x8xf32>,
    %cst_43 = arith.constant dense<0.000000e+00> : vector<8x8xf32>
    %66 = tpu.matmul %62, %50, %cst_43 {dimension_numbers = #tpu.dot_dimension_numbers<[1], [0], [0], [1], [0, 0, 1, 1], [], []>} : vector<8x8xf32>, vector<8x8xf32>, vector<8x8xf32> -> vector<8x8xf32>
    %c0_44 = arith.constant 0 : index
    %c8 = arith.constant 8 : index
    %67 = vector.load %arg15[%c0_44, %c8] : memref<8x32xf32, #tpu.memory_space<vmem>>, vector<8x8xf32>
    tpu.vector_store %arg15[%c0_44, %c8], %66 {strides = array<i32>} : memref<8x32xf32, #tpu.memory_space<vmem>>, vector<8x8xf32>,
    %68 = vector.extract_strided_slice %8 {offsets = [0, 16], sizes = [8, 8], strides = [1, 1]} : vector<8x32xf32> to vector<8x8xf32>
    %69 = vector.extract_strided_slice %15 {offsets = [0, 16], sizes = [8, 8], strides = [1, 1]} : vector<8x32xf32> to vector<8x8xf32>
    %70 = vector.extract_strided_slice %22 {offsets = [0, 16], sizes = [8, 8], strides = [1, 1]} : vector<8x32xf32> to vector<8x8xf32>
    %cst_45 = arith.constant dense<0.000000e+00> : vector<8x8xf32>
    %71 = tpu.matmul %68, %69, %cst_45 {dimension_numbers = #tpu.dot_dimension_numbers<[1], [1], [0], [0], [0, 0, 1, 0], [], []>} : vector<8x8xf32>, vector<8x8xf32>, vector<8x8xf32> -> vector<8x8xf32>
    %72 = arith.addf %71, %27 : vector<8x8xf32>
    %cst_46 = arith.constant dense<0xFF800000> : vector<8xf32>
    %73 = vector.multi_reduction <maximumf>, %72, %cst_46 [1] : vector<8x8xf32> to vector<8xf32>
    %74 = vector.shape_cast %73 : vector<8xf32> to vector<8x1xf32>
    %75 = vector.broadcast %74 : vector<8x1xf32> to vector<8x8xf32>
    %76 = arith.subf %72, %75 : vector<8x8xf32>
    %77 = math.exp %76 : vector<8x8xf32>
    %cst_47 = arith.constant dense<0.000000e+00> : vector<8xf32>
    %78 = vector.multi_reduction <add>, %77, %cst_47 [1] : vector<8x8xf32> to vector<8xf32>
    %79 = vector.shape_cast %78 : vector<8xf32> to vector<8x1xf32>
    %80 = tpu.reciprocal %79 {approx = true} : vector<8x1xf32> -> vector<8x1xf32>
    %81 = vector.broadcast %80 : vector<8x1xf32> to vector<8x8xf32>
    %82 = arith.mulf %77, %81 : vector<8x8xf32>
    %c0_48 = arith.constant 0 : index
    %c2 = arith.constant 2 : index
    %c0_49 = arith.constant 0 : index
    %c0_50 = arith.constant 0 : index
    %83 = vector.load %arg14[%c0_48, %c2, %c0_49, %c0_50] : memref<1x4x8x8xf32, #tpu.memory_space<vmem>>, vector<1x1x8x8xf32>
    %84 = vector.shape_cast %83 : vector<1x1x8x8xf32> to vector<8x8xf32>
    %85 = vector.shape_cast %82 : vector<8x8xf32> to vector<1x1x8x8xf32>
    tpu.vector_store %arg14[%c0_48, %c2, %c0_49, %c0_50], %85 {strides = array<i32>} : memref<1x4x8x8xf32, #tpu.memory_space<vmem>>, vector<1x1x8x8xf32>,
    %cst_51 = arith.constant dense<0.000000e+00> : vector<8x8xf32>
    %86 = tpu.matmul %82, %70, %cst_51 {dimension_numbers = #tpu.dot_dimension_numbers<[1], [0], [0], [1], [0, 0, 1, 1], [], []>} : vector<8x8xf32>, vector<8x8xf32>, vector<8x8xf32> -> vector<8x8xf32>
    %c0_52 = arith.constant 0 : index
    %c16 = arith.constant 16 : index
    %87 = vector.load %arg15[%c0_52, %c16] : memref<8x32xf32, #tpu.memory_space<vmem>>, vector<8x8xf32>
    tpu.vector_store %arg15[%c0_52, %c16], %86 {strides = array<i32>} : memref<8x32xf32, #tpu.memory_space<vmem>>, vector<8x8xf32>,
    %88 = vector.extract_strided_slice %8 {offsets = [0, 24], sizes = [8, 8], strides = [1, 1]} : vector<8x32xf32> to vector<8x8xf32>
    %89 = vector.extract_strided_slice %15 {offsets = [0, 24], sizes = [8, 8], strides = [1, 1]} : vector<8x32xf32> to vector<8x8xf32>
    %90 = vector.extract_strided_slice %22 {offsets = [0, 24], sizes = [8, 8], strides = [1, 1]} : vector<8x32xf32> to vector<8x8xf32>
    %cst_53 = arith.constant dense<0.000000e+00> : vector<8x8xf32>
    %91 = tpu.matmul %88, %89, %cst_53 {dimension_numbers = #tpu.dot_dimension_numbers<[1], [1], [0], [0], [0, 0, 1, 0], [], []>} : vector<8x8xf32>, vector<8x8xf32>, vector<8x8xf32> -> vector<8x8xf32>
    %92 = arith.addf %91, %27 : vector<8x8xf32>
    %cst_54 = arith.constant dense<0xFF800000> : vector<8xf32>
    %93 = vector.multi_reduction <maximumf>, %92, %cst_54 [1] : vector<8x8xf32> to vector<8xf32>
    %94 = vector.shape_cast %93 : vector<8xf32> to vector<8x1xf32>
    %95 = vector.broadcast %94 : vector<8x1xf32> to vector<8x8xf32>
    %96 = arith.subf %92, %95 : vector<8x8xf32>
    %97 = math.exp %96 : vector<8x8xf32>
    %cst_55 = arith.constant dense<0.000000e+00> : vector<8xf32>
    %98 = vector.multi_reduction <add>, %97, %cst_55 [1] : vector<8x8xf32> to vector<8xf32>
    %99 = vector.shape_cast %98 : vector<8xf32> to vector<8x1xf32>
    %100 = tpu.reciprocal %99 {approx = true} : vector<8x1xf32> -> vector<8x1xf32>
    %101 = vector.broadcast %100 : vector<8x1xf32> to vector<8x8xf32>
    %102 = arith.mulf %97, %101 : vector<8x8xf32>
    %c0_56 = arith.constant 0 : index
    %c3 = arith.constant 3 : index
    %c0_57 = arith.constant 0 : index
    %c0_58 = arith.constant 0 : index
    %103 = vector.load %arg14[%c0_56, %c3, %c0_57, %c0_58] : memref<1x4x8x8xf32, #tpu.memory_space<vmem>>, vector<1x1x8x8xf32>
    %104 = vector.shape_cast %103 : vector<1x1x8x8xf32> to vector<8x8xf32>
    %105 = vector.shape_cast %102 : vector<8x8xf32> to vector<1x1x8x8xf32>
    tpu.vector_store %arg14[%c0_56, %c3, %c0_57, %c0_58], %105 {strides = array<i32>} : memref<1x4x8x8xf32, #tpu.memory_space<vmem>>, vector<1x1x8x8xf32>,
    %cst_59 = arith.constant dense<0.000000e+00> : vector<8x8xf32>
    %106 = tpu.matmul %102, %90, %cst_59 {dimension_numbers = #tpu.dot_dimension_numbers<[1], [0], [0], [1], [0, 0, 1, 1], [], []>} : vector<8x8xf32>, vector<8x8xf32>, vector<8x8xf32> -> vector<8x8xf32>
    %c0_60 = arith.constant 0 : index
    %c24 = arith.constant 24 : index
    %107 = vector.load %arg15[%c0_60, %c24] : memref<8x32xf32, #tpu.memory_space<vmem>>, vector<8x8xf32>
    tpu.vector_store %arg15[%c0_60, %c24], %106 {strides = array<i32>} : memref<8x32xf32, #tpu.memory_space<vmem>>, vector<8x8xf32>,
    %c0_61 = arith.constant 0 : index
    %c0_62 = arith.constant 0 : index
    %108 = vector.load %arg15[%c0_61, %c0_62] : memref<8x32xf32, #tpu.memory_space<vmem>>, vector<8x32xf32>
    %c0_63 = arith.constant 0 : index
    %c0_64 = arith.constant 0 : index
    %109 = vector.load %arg11[%c0_63, %c0_64] : memref<32x32xf32, #tpu.memory_space<vmem>>, vector<32x32xf32>
    %cst_65 = arith.constant dense<0.000000e+00> : vector<8x32xf32>
    %110 = tpu.matmul %108, %109, %cst_65 {dimension_numbers = #tpu.dot_dimension_numbers<[1], [0], [0], [1], [0, 0, 1, 1], [], []>} : vector<8x32xf32>, vector<32x32xf32>, vector<8x32xf32> -> vector<8x32xf32>
    %c0_66 = arith.constant 0 : index
    %c0_67 = arith.constant 0 : index
    %111 = vector.load %arg12[%c0_66, %c0_67] : memref<1x32xf32, #tpu.memory_space<vmem>>, vector<1x32xf32>
    %112 = vector.broadcast %111 : vector<1x32xf32> to vector<8x32xf32>
    %113 = arith.addf %110, %112 : vector<8x32xf32>
    %c0_68 = arith.constant 0 : index
    %c0_69 = arith.constant 0 : index
    %c0_70 = arith.constant 0 : index
    %114 = vector.load %arg13[%c0_68, %c0_69, %c0_70] : memref<1x8x32xf32, #tpu.memory_space<vmem>>, vector<1x8x32xf32>
    %115 = vector.shape_cast %114 : vector<1x8x32xf32> to vector<8x32xf32>
    %116 = vector.shape_cast %113 : vector<8x32xf32> to vector<1x8x32xf32>
    tpu.vector_store %arg13[%c0_68, %c0_69, %c0_70], %116 {strides = array<i32>} : memref<1x8x32xf32, #tpu.memory_space<vmem>>, vector<1x8x32xf32>,
    return
  }
  func.func @transform_0(%arg0: i32) -> (i32, i32, i32) {
    %c0_i32 = arith.constant 0 : i32
    %c0_i32_0 = arith.constant 0 : i32
    %c0_i32_1 = arith.constant 0 : i32
    return %arg0, %c0_i32, %c0_i32_0 : i32, i32, i32
  }
  func.func @transform_1(%arg0: i32) -> (i32, i32, i32) {
    %c0_i32 = arith.constant 0 : i32
    %c0_i32_0 = arith.constant 0 : i32
    %c0_i32_1 = arith.constant 0 : i32
    return %arg0, %c0_i32, %c0_i32_0 : i32, i32, i32
  }
  func.func @transform_2(%arg0: i32) -> (i32, i32, i32) {
    %c0_i32 = arith.constant 0 : i32
    %c0_i32_0 = arith.constant 0 : i32
    %c0_i32_1 = arith.constant 0 : i32
    return %arg0, %c0_i32, %c0_i32_0 : i32, i32, i32
  }
  func.func @transform_3(%arg0: i32) -> (i32, i32, i32) {
    %c0_i32 = arith.constant 0 : i32
    %c0_i32_0 = arith.constant 0 : i32
    %c0_i32_1 = arith.constant 0 : i32
    return %arg0, %c0_i32, %c0_i32_0 : i32, i32, i32
  }
  func.func @transform_4(%arg0: i32) -> (i32, i32) {
    %c0_i32 = arith.constant 0 : i32
    %c0_i32_0 = arith.constant 0 : i32
    %c0_i32_1 = arith.constant 0 : i32
    return %c0_i32, %c0_i32_0 : i32, i32
  }
  func.func @transform_5(%arg0: i32) -> (i32, i32) {
    %c0_i32 = arith.constant 0 : i32
    %c0_i32_0 = arith.constant 0 : i32
    %c0_i32_1 = arith.constant 0 : i32
    return %c0_i32, %c0_i32_0 : i32, i32
  }
  func.func @transform_6(%arg0: i32) -> (i32, i32) {
    %c0_i32 = arith.constant 0 : i32
    %c0_i32_0 = arith.constant 0 : i32
    %c0_i32_1 = arith.constant 0 : i32
    return %c0_i32, %c0_i32_0 : i32, i32
  }
  func.func @transform_7(%arg0: i32) -> (i32, i32) {
    %c0_i32 = arith.constant 0 : i32
    %c0_i32_0 = arith.constant 0 : i32
    %c0_i32_1 = arith.constant 0 : i32
    return %c0_i32, %c0_i32_0 : i32, i32
  }
  func.func @transform_8(%arg0: i32) -> (i32, i32) {
    %c0_i32 = arith.constant 0 : i32
    %c0_i32_0 = arith.constant 0 : i32
    %c0_i32_1 = arith.constant 0 : i32
    return %c0_i32, %c0_i32_0 : i32, i32
  }
  func.func @transform_9(%arg0: i32) -> (i32, i32) {
    %c0_i32 = arith.constant 0 : i32
    %c0_i32_0 = arith.constant 0 : i32
    %c0_i32_1 = arith.constant 0 : i32
    return %c0_i32, %c0_i32_0 : i32, i32
  }
  func.func @transform_10(%arg0: i32) -> (i32, i32) {
    %c0_i32 = arith.constant 0 : i32
    %c0_i32_0 = arith.constant 0 : i32
    %c0_i32_1 = arith.constant 0 : i32
    return %c0_i32, %c0_i32_0 : i32, i32
  }
  func.func @transform_11(%arg0: i32) -> (i32, i32) {
    %c0_i32 = arith.constant 0 : i32
    %c0_i32_0 = arith.constant 0 : i32
    %c0_i32_1 = arith.constant 0 : i32
    return %c0_i32, %c0_i32_0 : i32, i32
  }
  func.func @transform_12(%arg0: i32) -> (i32, i32, i32) {
    %c0_i32 = arith.constant 0 : i32
    %c0_i32_0 = arith.constant 0 : i32
    %c0_i32_1 = arith.constant 0 : i32
    return %arg0, %c0_i32, %c0_i32_0 : i32, i32, i32
  }
  func.func @transform_13(%arg0: i32) -> (i32, i32, i32, i32) {
    %c0_i32 = arith.constant 0 : i32
    %c0_i32_0 = arith.constant 0 : i32
    %c0_i32_1 = arith.constant 0 : i32
    %c0_i32_2 = arith.constant 0 : i32
    return %arg0, %c0_i32, %c0_i32_0, %c0_i32_1 : i32, i32, i32, i32
  }
}

</mosaic_0001>

<llo_original>
// kernel: tpu_custom_call.1
$region0: #{tpu_custom_call.1}
  #allocation0 [shape = 'u32[]', space=smem, size = 0x4, offset = 0x4, fixed_abs, tag = 'smem constant byte address 0x4 - core index']
  #allocation1 [shape = 'u32[144,128]{1,0:T(1,128)}', space=vmem, size = 0x12000, scoped, tag = 'internal scratch']
  #allocation2 [shape = 'f32[8,32]{1,0:T(8,128)}', space=vmem, size = 0x1000, scoped, tag = 'scratch operand']
  %s0 = inlined_call_operand.hbm [shape: f32[2,8,32], index: 0, kind: input, shape index: {}]
  %s1 = inlined_call_operand.hbm [shape: f32[2,8,32], index: 1, kind: input, shape index: {}]
  %s2 = inlined_call_operand.hbm [shape: f32[2,8,32], index: 2, kind: input, shape index: {}]
  %s3 = inlined_call_operand.vmem [shape: s8[2,8,8], index: 3, kind: input, shape index: {}]
  %s4 = inlined_call_operand.hbm [shape: f32[32,32], index: 4, kind: input, shape index: {}]
  %s5 = inlined_call_operand.vmem [shape: f32[1,32], index: 5, kind: input, shape index: {}]
  %s6 = inlined_call_operand.hbm [shape: f32[32,32], index: 6, kind: input, shape index: {}]
  %s7 = inlined_call_operand.vmem [shape: f32[1,32], index: 7, kind: input, shape index: {}]
  %s8 = inlined_call_operand.hbm [shape: f32[32,32], index: 8, kind: input, shape index: {}]
  %s9 = inlined_call_operand.vmem [shape: f32[1,32], index: 9, kind: input, shape index: {}]
  %s10 = inlined_call_operand.hbm [shape: f32[32,32], index: 10, kind: input, shape index: {}]
  %s11 = inlined_call_operand.vmem [shape: f32[1,32], index: 11, kind: input, shape index: {}]
  %s12 = inlined_call_operand.hbm [shape: f32[2,8,32], index: 12, kind: output, shape index: {0}]
  %s13 = inlined_call_operand.hbm [shape: f32[2,4,8,8], index: 13, kind: output, shape index: {1}]
  %14 = xla_tuple %s12, %s13
  %s15 = sld [smem:[#allocation0]]
  $region117: #{tpu_custom_call.1} parent=0
    _
  %s17 = ssub.s32 1, %s15
  %s18 = scalar_select 0, %s17, %s15
  $region1: #{tpu_custom_call.1} parent=0
    #allocation3 [shape = 'u8[8192]{0}', space=vmem, size = 0x2000, scoped, tag = 'input window, operand 0']
    #allocation4 [shape = 's32[2]{0}', space=sflag, size = 0x8, scoped, tag = 'scoped memory for tpu_custom_call.1']
    #allocation5 [shape = 's32[2]{0}', space=sflag, size = 0x8, scoped, tag = 'scoped memory for tpu_custom_call.1']
    #allocation6 [shape = 'u8[8192]{0}', space=vmem, size = 0x2000, scoped, tag = 'input window, operand 1']
    #allocation7 [shape = 's32[2]{0}', space=sflag, size = 0x8, scoped, tag = 'scoped memory for tpu_custom_call.1']
    #allocation8 [shape = 'u8[8192]{0}', space=vmem, size = 0x2000, scoped, tag = 'input window, operand 2']
    #allocation9 [shape = 'u8[16384]{0}', space=vmem, size = 0x4000, scoped, tag = 'input window, operand 4, single buffered']
    #allocation10 [shape = 's32[1]{0}', space=sflag, size = 0x4, scoped, tag = 'scoped memory for tpu_custom_call.1']
    #allocation11 [shape = 'u8[16384]{0}', space=vmem, size = 0x4000, scoped, tag = 'input window, operand 6, single buffered']
    #allocation12 [shape = 'u8[16384]{0}', space=vmem, size = 0x4000, scoped, tag = 'input window, operand 8, single buffered']
    #allocation13 [shape = 's32[1]{0}', space=sflag, size = 0x4, scoped, tag = 'scoped memory for tpu_custom_call.1']
    #allocation14 [shape = 'u8[16384]{0}', space=vmem, size = 0x4000, scoped, tag = 'input window, operand 10, single buffered']
    #allocation15 [shape = 'u8[8192]{0}', space=vmem, size = 0x2000, scoped, tag = 'output window, operand 0']
    #allocation16 [shape = 'u8[32768]{0}', space=vmem, size = 0x8000, scoped, tag = 'output window, operand 1']
    #allocation17 [shape = 's32[2]{0}', space=sflag, size = 0x8, scoped, tag = 'scoped memory for tpu_custom_call.1']
    %19 = vsyncpa [#allocation4], 0
    %s20 = scalar_lea.sflag [#allocation4], 1
    %21 = vsyncpa %s20, 0
    %22 = vsyncpa [#allocation7], 0
    %s23 = scalar_lea.sflag [#allocation7], 1
    %24 = vsyncpa %s23, 0
    %25 = vsyncpa [#allocation10], 0
    %26 = vsyncpa [#allocation13], 0
    %27 = vsyncpa [#allocation5], 0
    %s28 = scalar_lea.sflag [#allocation5], 1
    %29 = vsyncpa %s28, 0
    %30 = vsyncpa [#allocation17], 0
    %s31 = scalar_lea.sflag [#allocation17], 1
    %32 = vsyncpa %s31, 0
    loop: start=0, step=1, limit=4
    $region2: #{tpu_custom_call.1} parent=1 // loop_pre_header
      _
    $region3: #{tpu_custom_call.1} parent=1 // loop_header
      %s34 = sphi 0, %s38
      %p35 = scmp.ge.s32.totalorder %s34, 4
      %s44 = sphi 0, %s46
      %s47 = sphi 0, %s44
      %s48 = sphi 0, %s47
      %s64 = sphi 0, %s48
      %s70 = sphi 0, %s72
      %s73 = sphi 0, %s70
      %s74 = sphi 0, %s73
      %s90 = sphi 0, %s74
      %s96 = sphi 0, %s98
      %s99 = sphi 0, %s96
      %s100 = sphi 0, %s99
      %s116 = sphi 0, %s100
      %s122 = sphi 0, %s124
      %s125 = sphi 0, %s122
      %s126 = sphi 0, %s125
      %s142 = sphi 0, %s126
      %s146 = sphi 0, %s146
      %s148 = sphi 0, %s146
      %s149 = sphi 0, %s148
      %s163 = sphi 0, %s149
      %s167 = sphi 0, %s167
      %s169 = sphi 0, %s167
      %s170 = sphi 0, %s169
      %s184 = sphi 0, %s170
      %s188 = sphi 0, %s188
      %s190 = sphi 0, %s188
      %s191 = sphi 0, %s190
      %s205 = sphi 0, %s191
      %s209 = sphi 0, %s209
      %s211 = sphi 0, %s209
      %s212 = sphi 0, %s211
      %s226 = sphi 0, %s212
      %s230 = sphi 0, %s230
      %s232 = sphi 0, %s230
      %s233 = sphi 0, %s232
      %s247 = sphi 0, %s233
      %s251 = sphi 0, %s251
      %s253 = sphi 0, %s251
      %s254 = sphi 0, %s253
      %s268 = sphi 0, %s254
      %s272 = sphi 0, %s272
      %s274 = sphi 0, %s272
      %s275 = sphi 0, %s274
      %s289 = sphi 0, %s275
      %s293 = sphi 0, %s293
      %s295 = sphi 0, %s293
      %s296 = sphi 0, %s295
      %s310 = sphi 0, %s296
      %s316 = sphi 0, %s318
      %s319 = sphi 0, %s316
      %s320 = sphi 0, %s319
      %s336 = sphi 0, %s320
      %s342 = sphi 0, %s344
      %s345 = sphi 0, %s342
      %s346 = sphi 0, %s345
      %s362 = sphi 0, %s346
    $region4: #{tpu_custom_call.1} parent=1 // loop_header_branch
      %37 = sbr.rel (%p35) target = $region8
    $region5: #{tpu_custom_call.1} parent=1 // loop_body
      %s39 = ssub.s32 %s34, 1
      %s40 = ssub.s32 %s34, 2
      %s41 = sadd.s32 %s34, 1
      %s42 = ssub.s32 %s34, %s41
      %p43 = scmp.eq.s32.totalorder %s42, 0
      %s45 = sadd.s32 %s44, 1
      %s46 = scalar_select %p43, %s44, %s45
      %p49 = pneg %p43
      %p50 = scmp.eq.s32.totalorder %s34, 1
      %p51 = por %p49, %p50
      %p52 = scmp.ne.s32.totalorder %s44, %s47
      %p53 = scmp.eq.s32.totalorder %s34, 0
      %p54 = por %p52, %p53
      %p55 = scmp.ne.s32.totalorder %s44, %s47
      %p56 = scmp.eq.s32.totalorder %s39, 1
      %p57 = por %p55, %p56
      %p58 = scmp.ne.s32.totalorder %s47, %s48
      %p59 = scmp.eq.s32.totalorder %s39, 0
      %p60 = por %p58, %p59
      %p61 = scmp.ne.s32.totalorder %s47, %s48
      %p62 = scmp.eq.s32.totalorder %s40, 1
      %p63 = por %p61, %p62
      %p65 = scmp.ne.s32.totalorder %s48, %s64
      %p66 = scmp.eq.s32.totalorder %s40, 0
      %p67 = por %p65, %p66
      %s68 = ssub.s32 %s34, %s41
      %p69 = scmp.eq.s32.totalorder %s68, 0
      %s71 = sadd.s32 %s70, 1
      %s72 = scalar_select %p69, %s70, %s71
      %p75 = pneg %p69
      %p76 = scmp.eq.s32.totalorder %s34, 1
      %p77 = por %p75, %p76
      %p78 = scmp.ne.s32.totalorder %s70, %s73
      %p79 = scmp.eq.s32.totalorder %s34, 0
      %p80 = por %p78, %p79
      %p81 = scmp.ne.s32.totalorder %s70, %s73
      %p82 = scmp.eq.s32.totalorder %s39, 1
      %p83 = por %p81, %p82
      %p84 = scmp.ne.s32.totalorder %s73, %s74
      %p85 = scmp.eq.s32.totalorder %s39, 0
      %p86 = por %p84, %p85
      %p87 = scmp.ne.s32.totalorder %s73, %s74
      %p88 = scmp.eq.s32.totalorder %s40, 1
      %p89 = por %p87, %p88
      %p91 = scmp.ne.s32.totalorder %s74, %s90
      %p92 = scmp.eq.s32.totalorder %s40, 0
      %p93 = por %p91, %p92
      %s94 = ssub.s32 %s34, %s41
      %p95 = scmp.eq.s32.totalorder %s94, 0
      %s97 = sadd.s32 %s96, 1
      %s98 = scalar_select %p95, %s96, %s97
      %p101 = pneg %p95
      %p102 = scmp.eq.s32.totalorder %s34, 1
      %p103 = por %p101, %p102
      %p104 = scmp.ne.s32.totalorder %s96, %s99
      %p105 = scmp.eq.s32.totalorder %s34, 0
      %p106 = por %p104, %p105
      %p107 = scmp.ne.s32.totalorder %s96, %s99
      %p108 = scmp.eq.s32.totalorder %s39, 1
      %p109 = por %p107, %p108
      %p110 = scmp.ne.s32.totalorder %s99, %s100
      %p111 = scmp.eq.s32.totalorder %s39, 0
      %p112 = por %p110, %p111
      %p113 = scmp.ne.s32.totalorder %s99, %s100
      %p114 = scmp.eq.s32.totalorder %s40, 1
      %p115 = por %p113, %p114
      %p117 = scmp.ne.s32.totalorder %s100, %s116
      %p118 = scmp.eq.s32.totalorder %s40, 0
      %p119 = por %p117, %p118
      %s120 = ssub.s32 %s34, %s41
      %p121 = scmp.eq.s32.totalorder %s120, 0
      %s123 = sadd.s32 %s122, 1
      %s124 = scalar_select %p121, %s122, %s123
      %p127 = pneg %p121
      %p128 = scmp.eq.s32.totalorder %s34, 1
      %p129 = por %p127, %p128
      %p130 = scmp.ne.s32.totalorder %s122, %s125
      %p131 = scmp.eq.s32.totalorder %s34, 0
      %p132 = por %p130, %p131
      %p133 = scmp.ne.s32.totalorder %s122, %s125
      %p134 = scmp.eq.s32.totalorder %s39, 1
      %p135 = por %p133, %p134
      %p136 = scmp.ne.s32.totalorder %s125, %s126
      %p137 = scmp.eq.s32.totalorder %s39, 0
      %p138 = por %p136, %p137
      %p139 = scmp.ne.s32.totalorder %s125, %s126
      %p140 = scmp.eq.s32.totalorder %s40, 1
      %p141 = por %p139, %p140
      %p143 = scmp.ne.s32.totalorder %s126, %s142
      %p144 = scmp.eq.s32.totalorder %s40, 0
      %p145 = por %p143, %p144
      %s147 = sadd.s32 %s146, 1
      %p150 = scmp.eq.s32.totalorder %s34, 1
      %p151 = scmp.ne.s32.totalorder %s146, %s148
      %p152 = scmp.eq.s32.totalorder %s34, 0
      %p153 = por %p151, %p152
      %p154 = scmp.ne.s32.totalorder %s146, %s148
      %p155 = scmp.eq.s32.totalorder %s39, 1
      %p156 = por %p154, %p155
      %p157 = scmp.ne.s32.totalorder %s148, %s149
      %p158 = scmp.eq.s32.totalorder %s39, 0
      %p159 = por %p157, %p158
      %p160 = scmp.ne.s32.totalorder %s148, %s149
      %p161 = scmp.eq.s32.totalorder %s40, 1
      %p162 = por %p160, %p161
      %p164 = scmp.ne.s32.totalorder %s149, %s163
      %p165 = scmp.eq.s32.totalorder %s40, 0
      %p166 = por %p164, %p165
      %s168 = sadd.s32 %s167, 1
      %p171 = scmp.eq.s32.totalorder %s34, 1
      %p172 = scmp.ne.s32.totalorder %s167, %s169
      %p173 = scmp.eq.s32.totalorder %s34, 0
      %p174 = por %p172, %p173
      %p175 = scmp.ne.s32.totalorder %s167, %s169
      %p176 = scmp.eq.s32.totalorder %s39, 1
      %p177 = por %p175, %p176
      %p178 = scmp.ne.s32.totalorder %s169, %s170
      %p179 = scmp.eq.s32.totalorder %s39, 0
      %p180 = por %p178, %p179
      %p181 = scmp.ne.s32.totalorder %s169, %s170
      %p182 = scmp.eq.s32.totalorder %s40, 1
      %p183 = por %p181, %p182
      %p185 = scmp.ne.s32.totalorder %s170, %s184
      %p186 = scmp.eq.s32.totalorder %s40, 0
      %p187 = por %p185, %p186
      %s189 = sadd.s32 %s188, 1
      %p192 = scmp.eq.s32.totalorder %s34, 1
      %p193 = scmp.ne.s32.totalorder %s188, %s190
      %p194 = scmp.eq.s32.totalorder %s34, 0
      %p195 = por %p193, %p194
      %p196 = scmp.ne.s32.totalorder %s188, %s190
      %p197 = scmp.eq.s32.totalorder %s39, 1
      %p198 = por %p196, %p197
      %p199 = scmp.ne.s32.totalorder %s190, %s191
      %p200 = scmp.eq.s32.totalorder %s39, 0
      %p201 = por %p199, %p200
      %p202 = scmp.ne.s32.totalorder %s190, %s191
      %p203 = scmp.eq.s32.totalorder %s40, 1
      %p204 = por %p202, %p203
      %p206 = scmp.ne.s32.totalorder %s191, %s205
      %p207 = scmp.eq.s32.totalorder %s40, 0
      %p208 = por %p206, %p207
      %s210 = sadd.s32 %s209, 1
      %p213 = scmp.eq.s32.totalorder %s34, 1
      %p214 = scmp.ne.s32.totalorder %s209, %s211
      %p215 = scmp.eq.s32.totalorder %s34, 0
      %p216 = por %p214, %p215
      %p217 = scmp.ne.s32.totalorder %s209, %s211
      %p218 = scmp.eq.s32.totalorder %s39, 1
      %p219 = por %p217, %p218
      %p220 = scmp.ne.s32.totalorder %s211, %s212
      %p221 = scmp.eq.s32.totalorder %s39, 0
      %p222 = por %p220, %p221
      %p223 = scmp.ne.s32.totalorder %s211, %s212
      %p224 = scmp.eq.s32.totalorder %s40, 1
      %p225 = por %p223, %p224
      %p227 = scmp.ne.s32.totalorder %s212, %s226
      %p228 = scmp.eq.s32.totalorder %s40, 0
      %p229 = por %p227, %p228
      %s231 = sadd.s32 %s230, 1
      %p234 = scmp.eq.s32.totalorder %s34, 1
      %p235 = scmp.ne.s32.totalorder %s230, %s232
      %p236 = scmp.eq.s32.totalorder %s34, 0
      %p237 = por %p235, %p236
      %p238 = scmp.ne.s32.totalorder %s230, %s232
      %p239 = scmp.eq.s32.totalorder %s39, 1
      %p240 = por %p238, %p239
      %p241 = scmp.ne.s32.totalorder %s232, %s233
      %p242 = scmp.eq.s32.totalorder %s39, 0
      %p243 = por %p241, %p242
      %p244 = scmp.ne.s32.totalorder %s232, %s233
      %p245 = scmp.eq.s32.totalorder %s40, 1
      %p246 = por %p244, %p245
      %p248 = scmp.ne.s32.totalorder %s233, %s247
      %p249 = scmp.eq.s32.totalorder %s40, 0
      %p250 = por %p248, %p249
      %s252 = sadd.s32 %s251, 1
      %p255 = scmp.eq.s32.totalorder %s34, 1
      %p256 = scmp.ne.s32.totalorder %s251, %s253
      %p257 = scmp.eq.s32.totalorder %s34, 0
      %p258 = por %p256, %p257
      %p259 = scmp.ne.s32.totalorder %s251, %s253
      %p260 = scmp.eq.s32.totalorder %s39, 1
      %p261 = por %p259, %p260
      %p262 = scmp.ne.s32.totalorder %s253, %s254
      %p263 = scmp.eq.s32.totalorder %s39, 0
      %p264 = por %p262, %p263
      %p265 = scmp.ne.s32.totalorder %s253, %s254
      %p266 = scmp.eq.s32.totalorder %s40, 1
      %p267 = por %p265, %p266
      %p269 = scmp.ne.s32.totalorder %s254, %s268
      %p270 = scmp.eq.s32.totalorder %s40, 0
      %p271 = por %p269, %p270
      %s273 = sadd.s32 %s272, 1
      %p276 = scmp.eq.s32.totalorder %s34, 1
      %p277 = scmp.ne.s32.totalorder %s272, %s274
      %p278 = scmp.eq.s32.totalorder %s34, 0
      %p279 = por %p277, %p278
      %p280 = scmp.ne.s32.totalorder %s272, %s274
      %p281 = scmp.eq.s32.totalorder %s39, 1
      %p282 = por %p280, %p281
      %p283 = scmp.ne.s32.totalorder %s274, %s275
      %p284 = scmp.eq.s32.totalorder %s39, 0
      %p285 = por %p283, %p284
      %p286 = scmp.ne.s32.totalorder %s274, %s275
      %p287 = scmp.eq.s32.totalorder %s40, 1
      %p288 = por %p286, %p287
      %p290 = scmp.ne.s32.totalorder %s275, %s289
      %p291 = scmp.eq.s32.totalorder %s40, 0
      %p292 = por %p290, %p291
      %s294 = sadd.s32 %s293, 1
      %p297 = scmp.eq.s32.totalorder %s34, 1
      %p298 = scmp.ne.s32.totalorder %s293, %s295
      %p299 = scmp.eq.s32.totalorder %s34, 0
      %p300 = por %p298, %p299
      %p301 = scmp.ne.s32.totalorder %s293, %s295
      %p302 = scmp.eq.s32.totalorder %s39, 1
      %p303 = por %p301, %p302
      %p304 = scmp.ne.s32.totalorder %s295, %s296
      %p305 = scmp.eq.s32.totalorder %s39, 0
      %p306 = por %p304, %p305
      %p307 = scmp.ne.s32.totalorder %s295, %s296
      %p308 = scmp.eq.s32.totalorder %s40, 1
      %p309 = por %p307, %p308
      %p311 = scmp.ne.s32.totalorder %s296, %s310
      %p312 = scmp.eq.s32.totalorder %s40, 0
      %p313 = por %p311, %p312
      %s314 = ssub.s32 %s34, %s41
      %p315 = scmp.eq.s32.totalorder %s314, 0
      %s317 = sadd.s32 %s316, 1
      %s318 = scalar_select %p315, %s316, %s317
      %p321 = pneg %p315
      %p322 = scmp.eq.s32.totalorder %s34, 1
      %p323 = por %p321, %p322
      %p324 = scmp.ne.s32.totalorder %s316, %s319
      %p325 = scmp.eq.s32.totalorder %s34, 0
      %p326 = por %p324, %p325
      %p327 = scmp.ne.s32.totalorder %s316, %s319
      %p328 = scmp.eq.s32.totalorder %s39, 1
      %p329 = por %p327, %p328
      %p330 = scmp.ne.s32.totalorder %s319, %s320
      %p331 = scmp.eq.s32.totalorder %s39, 0
      %p332 = por %p330, %p331
      %p333 = scmp.ne.s32.totalorder %s319, %s320
      %p334 = scmp.eq.s32.totalorder %s40, 1
      %p335 = por %p333, %p334
      %p337 = scmp.ne.s32.totalorder %s320, %s336
      %p338 = scmp.eq.s32.totalorder %s40, 0
      %p339 = por %p337, %p338
      %s340 = ssub.s32 %s34, %s41
      %p341 = scmp.eq.s32.totalorder %s340, 0
      %s343 = sadd.s32 %s342, 1
      %s344 = scalar_select %p341, %s342, %s343
      %p347 = pneg %p341
      %p348 = scmp.eq.s32.totalorder %s34, 1
      %p349 = por %p347, %p348
      %p350 = scmp.ne.s32.totalorder %s342, %s345
      %p351 = scmp.eq.s32.totalorder %s34, 0
      %p352 = por %p350, %p351
      %p353 = scmp.ne.s32.totalorder %s342, %s345
      %p354 = scmp.eq.s32.totalorder %s39, 1
      %p355 = por %p353, %p354
      %p356 = scmp.ne.s32.totalorder %s345, %s346
      %p357 = scmp.eq.s32.totalorder %s39, 0
      %p358 = por %p356, %p357
      %p359 = scmp.ne.s32.totalorder %s345, %s346
      %p360 = scmp.eq.s32.totalorder %s40, 1
      %p361 = por %p359, %p360
      %p363 = scmp.ne.s32.totalorder %s346, %s362
      %p364 = scmp.eq.s32.totalorder %s40, 0
      %p365 = por %p363, %p364
      %p366 = scmp.le.s32.totalorder 1, %s34
      %p367 = scmp.lt.s32.totalorder %s34, 3
      %p368 = pnand %p366, %p367
      %p369 = pneg %p368
      // Predicated region
      $region9: #{tpu_custom_call.1} parent=5 // pred_check
        _
      $region10: #{tpu_custom_call.1} parent=5 // pred_check_branch
        %371 = sbr.rel (%p368) target = $region12
      $region11: #{tpu_custom_call.1} parent=5 // pred_region
        %s372 = ssub.s32 %s34, 1
        // Predicated region
        $region13: #{tpu_custom_call.1} parent=11 // pred_check
          %p373 = pneg %p159
        $region14: #{tpu_custom_call.1} parent=11 // pred_check_branch
          %375 = sbr.rel (%p373) target = $region16
        $region15: #{tpu_custom_call.1} parent=11 // pred_region
          %s377 = ssub.s32 512, 512
          %378 = vsyncadd [#allocation10], %s377
          %s379 = sshll.u32 [#allocation9], 4
          %s380 = int_to_ptr.vmem [resolvable:$true] %s379
          %385 = dma.hbm_to_vmem [thread:$0]  %s4, 512, %s380, [#allocation10], 128, 128, 8
        $region16: #{tpu_custom_call.1} parent=11 // pred_fallthru
          _
        // Predicated region
        $region17: #{tpu_custom_call.1} parent=11 // pred_check
          %p386 = pneg %p180
        $region18: #{tpu_custom_call.1} parent=11 // pred_check_branch
          %388 = sbr.rel (%p386) target = $region20
        $region19: #{tpu_custom_call.1} parent=11 // pred_region
          _
        $region20: #{tpu_custom_call.1} parent=11 // pred_fallthru
          _
        // Predicated region
        $region21: #{tpu_custom_call.1} parent=11 // pred_check
          %p389 = pneg %p201
        $region22: #{tpu_custom_call.1} parent=11 // pred_check_branch
          %391 = sbr.rel (%p389) target = $region24
        $region23: #{tpu_custom_call.1} parent=11 // pred_region
          %s393 = ssub.s32 512, 512
          %394 = vsyncadd [#allocation10], %s393
          %s395 = sshll.u32 [#allocation11], 4
          %s396 = int_to_ptr.vmem [resolvable:$true] %s395
          %401 = dma.hbm_to_vmem [thread:$0]  %s6, 512, %s396, [#allocation10], 128, 128, 8
        $region24: #{tpu_custom_call.1} parent=11 // pred_fallthru
          _
        // Predicated region
        $region25: #{tpu_custom_call.1} parent=11 // pred_check
          %p402 = pneg %p222
        $region26: #{tpu_custom_call.1} parent=11 // pred_check_branch
          %404 = sbr.rel (%p402) target = $region28
        $region27: #{tpu_custom_call.1} parent=11 // pred_region
          _
        $region28: #{tpu_custom_call.1} parent=11 // pred_fallthru
          _
        // Predicated region
        $region29: #{tpu_custom_call.1} parent=11 // pred_check
          %p405 = pneg %p243
        $region30: #{tpu_custom_call.1} parent=11 // pred_check_branch
          %407 = sbr.rel (%p405) target = $region32
        $region31: #{tpu_custom_call.1} parent=11 // pred_region
          %s409 = ssub.s32 512, 512
          %410 = vsyncadd [#allocation13], %s409
          %s411 = sshll.u32 [#allocation12], 4
          %s412 = int_to_ptr.vmem [resolvable:$true] %s411
          %417 = dma.hbm_to_vmem [thread:$0]  %s8, 512, %s412, [#allocation13], 128, 128, 8
        $region32: #{tpu_custom_call.1} parent=11 // pred_fallthru
          _
        // Predicated region
        $region33: #{tpu_custom_call.1} parent=11 // pred_check
          %p418 = pneg %p264
        $region34: #{tpu_custom_call.1} parent=11 // pred_check_branch
          %420 = sbr.rel (%p418) target = $region36
        $region35: #{tpu_custom_call.1} parent=11 // pred_region
          _
        $region36: #{tpu_custom_call.1} parent=11 // pred_fallthru
          _
        // Predicated region
        $region37: #{tpu_custom_call.1} parent=11 // pred_check
          %p421 = pneg %p285
        $region38: #{tpu_custom_call.1} parent=11 // pred_check_branch
          %423 = sbr.rel (%p421) target = $region40
        $region39: #{tpu_custom_call.1} parent=11 // pred_region
          %s425 = ssub.s32 512, 512
          %426 = vsyncadd [#allocation13], %s425
          %s427 = sshll.u32 [#allocation14], 4
          %s428 = int_to_ptr.vmem [resolvable:$true] %s427
          %433 = dma.hbm_to_vmem [thread:$0]  %s10, 512, %s428, [#allocation13], 128, 128, 8
        $region40: #{tpu_custom_call.1} parent=11 // pred_fallthru
          _
        // Predicated region
        $region41: #{tpu_custom_call.1} parent=11 // pred_check
          %p434 = pneg %p306
        $region42: #{tpu_custom_call.1} parent=11 // pred_check_branch
          %436 = sbr.rel (%p434) target = $region44
        $region43: #{tpu_custom_call.1} parent=11 // pred_region
          _
        $region44: #{tpu_custom_call.1} parent=11 // pred_fallthru
          _
      $region12: #{tpu_custom_call.1} parent=5 // pred_fallthru
        _
      %p437 = scmp.lt.s32.totalorder %s34, 2
      // Predicated region
      $region45: #{tpu_custom_call.1} parent=5 // pred_check
        %p438 = pneg %p437
      $region46: #{tpu_custom_call.1} parent=5 // pred_check_branch
        %440 = sbr.rel (%p438) target = $region48
      $region47: #{tpu_custom_call.1} parent=5 // pred_region
        // Predicated region
        $region49: #{tpu_custom_call.1} parent=47 // pred_check
          %p441 = pneg %p54
        $region50: #{tpu_custom_call.1} parent=47 // pred_check_branch
          %443 = sbr.rel (%p441) target = $region52
        $region51: #{tpu_custom_call.1} parent=47 // pred_region
          %s444 = sand.u32 %s44, 1
          %s445 = scalar_lea.sflag [#allocation4], %s444
          %s446 = sand.u32 %s44, 1
          %s447 = smul.addr %s446, 8
          %s448 = scalar_lea.vmem [#allocation3], %s447
          %s450 = ssub.s32 128, 128
          %451 = vsyncadd %s445, %s450
          %s452 = smul.addr %s34, 128
          %s453 = scalar_lea.hbm %s0, %s452
          %s455 = sshll.u32 %s448, 4
          %s456 = int_to_ptr.vmem [resolvable:$true] %s455
          %458 = dma.hbm_to_vmem [thread:$0]  %s453, 128, %s456, %s445
        $region52: #{tpu_custom_call.1} parent=47 // pred_fallthru
          _
        // Predicated region
        $region53: #{tpu_custom_call.1} parent=47 // pred_check
          %p459 = pneg %p80
        $region54: #{tpu_custom_call.1} parent=47 // pred_check_branch
          %461 = sbr.rel (%p459) target = $region56
        $region55: #{tpu_custom_call.1} parent=47 // pred_region
          %s462 = sand.u32 %s34, 1
          %s463 = scalar_lea.sflag [#allocation7], %s462
          %s464 = sand.u32 %s70, 1
          %s465 = smul.addr %s464, 8
          %s466 = scalar_lea.vmem [#allocation6], %s465
          %s468 = ssub.s32 128, 128
          %469 = vsyncadd %s463, %s468
          %s470 = smul.addr %s34, 128
          %s471 = scalar_lea.hbm %s1, %s470
          %s473 = sshll.u32 %s466, 4
          %s474 = int_to_ptr.vmem [resolvable:$true] %s473
          %476 = dma.hbm_to_vmem [thread:$0]  %s471, 128, %s474, %s463
        $region56: #{tpu_custom_call.1} parent=47 // pred_fallthru
          _
        // Predicated region
        $region57: #{tpu_custom_call.1} parent=47 // pred_check
          %p477 = pneg %p106
        $region58: #{tpu_custom_call.1} parent=47 // pred_check_branch
          %479 = sbr.rel (%p477) target = $region60
        $region59: #{tpu_custom_call.1} parent=47 // pred_region
          %s480 = sand.u32 %s34, 1
          %s481 = scalar_lea.sflag [#allocation7], %s480
          %s482 = sand.u32 %s96, 1
          %s483 = smul.addr %s482, 8
          %s484 = scalar_lea.vmem [#allocation8], %s483
          %s486 = ssub.s32 128, 128
          %487 = vsyncadd %s481, %s486
          %s488 = smul.addr %s34, 128
          %s489 = scalar_lea.hbm %s2, %s488
          %s491 = sshll.u32 %s484, 4
          %s492 = int_to_ptr.vmem [resolvable:$true] %s491
          %494 = dma.hbm_to_vmem [thread:$0]  %s489, 128, %s492, %s481
        $region60: #{tpu_custom_call.1} parent=47 // pred_fallthru
          _
        // Predicated region
        $region61: #{tpu_custom_call.1} parent=47 // pred_check
          %p495 = pneg %p132
        $region62: #{tpu_custom_call.1} parent=47 // pred_check_branch
          %497 = sbr.rel (%p495) target = $region64
        $region63: #{tpu_custom_call.1} parent=47 // pred_region
          %p498 = scmp.lt.s32.totalorder %s34, 1
          %s499 = scalar_select %p498, %s34, 1
          %s500 = smul.addr %s499, 2
          %s501 = scalar_lea.vmem %s3, %s500
        $region64: #{tpu_custom_call.1} parent=47 // pred_fallthru
          _
      $region48: #{tpu_custom_call.1} parent=5 // pred_fallthru
        _
      %p502 = scmp.le.s32.totalorder 1, %s34
      %p503 = scmp.lt.s32.totalorder %s34, 3
      %p504 = pnand %p502, %p503
      %p505 = pneg %p504
      // Predicated region
      $region65: #{tpu_custom_call.1} parent=5 // pred_check
        _
      $region66: #{tpu_custom_call.1} parent=5 // pred_check_branch
        %507 = sbr.rel (%p504) target = $region68
      $region67: #{tpu_custom_call.1} parent=5 // pred_region
        %s508 = ssub.s32 %s34, 1
        %s509 = sand.u32 %s47, 1
        %s510 = scalar_lea.sflag [#allocation4], %s509
        %s511 = sand.u32 %s47, 1
        %s512 = smul.addr %s511, 8
        %s513 = scalar_lea.vmem [#allocation3], %s512
        // Predicated region
        $region69: #{tpu_custom_call.1} parent=67 // pred_check
          %p514 = pneg %p60
        $region70: #{tpu_custom_call.1} parent=67 // pred_check_branch
          %516 = sbr.rel (%p514) target = $region72
        $region71: #{tpu_custom_call.1} parent=67 // pred_region
          %517 = dma.done %s510, 128
        $region72: #{tpu_custom_call.1} parent=67 // pred_fallthru
          _
        %s518 = sand.u32 %s39, 1
        %s519 = scalar_lea.sflag [#allocation7], %s518
        %s520 = sand.u32 %s73, 1
        %s521 = smul.addr %s520, 8
        %s522 = scalar_lea.vmem [#allocation6], %s521
        // Predicated region
        $region73: #{tpu_custom_call.1} parent=67 // pred_check
          %p523 = pneg %p86
        $region74: #{tpu_custom_call.1} parent=67 // pred_check_branch
          %525 = sbr.rel (%p523) target = $region76
        $region75: #{tpu_custom_call.1} parent=67 // pred_region
          %526 = dma.done %s519, 128
        $region76: #{tpu_custom_call.1} parent=67 // pred_fallthru
          _
        %s527 = sand.u32 %s39, 1
        %s528 = scalar_lea.sflag [#allocation7], %s527
        %s529 = sand.u32 %s99, 1
        %s530 = smul.addr %s529, 8
        %s531 = scalar_lea.vmem [#allocation8], %s530
        // Predicated region
        $region77: #{tpu_custom_call.1} parent=67 // pred_check
          %p532 = pneg %p112
        $region78: #{tpu_custom_call.1} parent=67 // pred_check_branch
          %534 = sbr.rel (%p532) target = $region80
        $region79: #{tpu_custom_call.1} parent=67 // pred_region
          %535 = dma.done %s528, 128
        $region80: #{tpu_custom_call.1} parent=67 // pred_fallthru
          _
        // Predicated region
        $region81: #{tpu_custom_call.1} parent=67 // pred_check
          %p536 = pneg %p159
        $region82: #{tpu_custom_call.1} parent=67 // pred_check_branch
          %538 = sbr.rel (%p536) target = $region84
        $region83: #{tpu_custom_call.1} parent=67 // pred_region
          %539 = dma.done [#allocation10], 512
        $region84: #{tpu_custom_call.1} parent=67 // pred_fallthru
          _
        // Predicated region
        $region85: #{tpu_custom_call.1} parent=67 // pred_check
          %p540 = pneg %p201
        $region86: #{tpu_custom_call.1} parent=67 // pred_check_branch
          %542 = sbr.rel (%p540) target = $region88
        $region87: #{tpu_custom_call.1} parent=67 // pred_region
          %543 = dma.done [#allocation10], 512
        $region88: #{tpu_custom_call.1} parent=67 // pred_fallthru
          _
        // Predicated region
        $region89: #{tpu_custom_call.1} parent=67 // pred_check
          %p544 = pneg %p243
        $region90: #{tpu_custom_call.1} parent=67 // pred_check_branch
          %546 = sbr.rel (%p544) target = $region92
        $region91: #{tpu_custom_call.1} parent=67 // pred_region
          %547 = dma.done [#allocation13], 512
        $region92: #{tpu_custom_call.1} parent=67 // pred_fallthru
          _
        // Predicated region
        $region93: #{tpu_custom_call.1} parent=67 // pred_check
          %p548 = pneg %p285
        $region94: #{tpu_custom_call.1} parent=67 // pred_check_branch
          %550 = sbr.rel (%p548) target = $region96
        $region95: #{tpu_custom_call.1} parent=67 // pred_region
          %551 = dma.done [#allocation13], 512
        $region96: #{tpu_custom_call.1} parent=67 // pred_fallthru
          _
        %s552 = sand.u32 %s47, 1
        %s553 = scalar_lea.sflag [#allocation4], %s552
        %s554 = sand.u32 %s47, 1
        %s555 = smul.addr %s554, 8
        %s556 = scalar_lea.vmem [#allocation3], %s555
        %p557 = pneg %p60
        %p558 = pneg %p57
        %s559 = sand.u32 %s39, 1
        %s560 = scalar_lea.sflag [#allocation7], %s559
        %s561 = sand.u32 %s73, 1
        %s562 = smul.addr %s561, 8
        %s563 = scalar_lea.vmem [#allocation6], %s562
        %p564 = pneg %p86
        %p565 = pneg %p83
        %s566 = sand.u32 %s39, 1
        %s567 = scalar_lea.sflag [#allocation7], %s566
        %s568 = sand.u32 %s99, 1
        %s569 = smul.addr %s568, 8
        %s570 = scalar_lea.vmem [#allocation8], %s569
        %p571 = pneg %p112
        %p572 = pneg %p109
        %p573 = scmp.lt.s32.totalorder %s39, 1
        %s574 = scalar_select %p573, %s39, 1
        %s575 = smul.addr %s574, 2
        %s576 = scalar_lea.vmem %s3, %s575
        %p577 = pneg %p138
        %p578 = pneg %p135
        %p579 = pneg %p159
        %p580 = pneg %p156
        %p581 = pneg %p180
        %p582 = pneg %p177
        %p583 = pneg %p201
        %p584 = pneg %p198
        %p585 = pneg %p222
        %p586 = pneg %p219
        %p587 = pneg %p243
        %p588 = pneg %p240
        %p589 = pneg %p264
        %p590 = pneg %p261
        %p591 = pneg %p285
        %p592 = pneg %p282
        %p593 = pneg %p306
        %p594 = pneg %p303
        %p595 = pneg %p332
        %p596 = pneg %p329
        %s597 = sand.u32 %s319, 1
        %s598 = scalar_lea.sflag [#allocation5], %s597
        %s599 = sand.u32 %s319, 1
        %s600 = smul.addr %s599, 8
        %s601 = scalar_lea.vmem [#allocation15], %s600
        %p602 = pneg %p358
        %p603 = pneg %p355
        %s604 = sand.u32 %s345, 1
        %s605 = scalar_lea.sflag [#allocation17], %s604
        %s606 = sand.u32 %s345, 1
        %s607 = smul.addr %s606, 32
        %s608 = scalar_lea.vmem [#allocation16], %s607
        %p609 = scmp.lt.s32.totalorder %s39, 1
        %s610 = scalar_select %p609, %s39, 1
        %s611 = smul.addr %s610, 2
        %s612 = scalar_lea.vmem %s3, %s611
        %v613 = vld [vmem:[%s513] sm:$0xff]
        %v614 = vld [vmem:[#allocation9] sm:$0xff]
        %v615 = vld [vmem:[#allocation9 + $0x8] sm:$0xff]
        %v616 = vld [vmem:[#allocation9 + $0x10] sm:$0xff]
        %v617 = vld [vmem:[#allocation9 + $0x18] sm:$0xff]
        %v618 = vld [vmem:[%s5] sm:$0x1]
        %v620 = vlaneseq
        %v621 = vshrl.u32 %v620, 7
        %v622 = vsub.s32 0, %v621
        %v623 = vrot.slane %v618, %v622
        %vm625 = vcmask 261120
        %v627 = vsel %vm625, %v613, 0
        %629 = vmatprep.subr.mxu0 0.0
        %630 = vmatpush1.msra.mxu0 0.0
        %631 = vmatprep.subr.mxu0 0.0
        %632 = vmatpush1.msra.mxu0 0.0
        %633 = vmatprep.subr.mxu0 0.0
        %634 = vmatpush1.msra.mxu0 0.0
        %635 = vmatprep.subr.mxu0 0.0
        %636 = vmatpush1.msra.mxu0 0.0
        %637 = vmatprep.subr.mxu0 0.0
        %638 = vmatpush1.msra.mxu0 0.0
        %639 = vmatprep.subr.mxu0 0.0
        %640 = vmatpush1.msra.mxu0 0.0
        %641 = vmatprep.subr.mxu0 0.0
        %642 = vmatpush1.msra.mxu0 0.0
        %643 = vmatprep.subr.mxu0 0.0
        %644 = vmatpush1.msra.mxu0 0.0
        %645 = vmatprep.subr.mxu0 0.0
        %646 = vmatpush1.msra.mxu0 0.0
        %647 = vmatprep.subr.mxu0 0.0
        %648 = vmatpush1.msra.mxu0 0.0
        %649 = vmatprep.subr.mxu0 0.0
        %650 = vmatpush1.msra.mxu0 0.0
        %651 = vmatprep.subr.mxu0 0.0
        %652 = vmatpush1.msra.mxu0 0.0
        %653 = vmatprep.subr.mxu0 0.0
        %654 = vmatpush1.msra.mxu0 %v617
        %655 = vmatprep.subr.mxu0 0.0
        %656 = vmatpush1.msra.mxu0 %v616
        %657 = vmatprep.subr.mxu0 0.0
        %658 = vmatpush1.msra.mxu0 %v615
        %659 = vmatprep.subr.mxu0 0.0
        %660 = vmatpush1.msra.mxu0 %v614
        %661 = vmatprep.subr.mxu0 0.0
        %662 = vmatpush2.msra.mxu0 0.0
        %663 = vmatprep.subr.mxu0 0.0
        %664 = vmatpush2.msra.mxu0 0.0
        %665 = vmatprep.subr.mxu0 0.0
        %666 = vmatpush2.msra.mxu0 0.0
        %667 = vmatprep.subr.mxu0 0.0
        %668 = vmatpush2.msra.mxu0 0.0
        %669 = vmatprep.subr.mxu0 0.0
        %670 = vmatpush2.msra.mxu0 0.0
        %671 = vmatprep.subr.mxu0 0.0
        %672 = vmatpush2.msra.mxu0 0.0
        %673 = vmatprep.subr.mxu0 0.0
        %674 = vmatpush2.msra.mxu0 0.0
        %675 = vmatprep.subr.mxu0 0.0
        %676 = vmatpush2.msra.mxu0 0.0
        %677 = vmatprep.subr.mxu0 0.0
        %678 = vmatpush2.msra.mxu0 0.0
        %679 = vmatprep.subr.mxu0 0.0
        %680 = vmatpush2.msra.mxu0 0.0
        %681 = vmatprep.subr.mxu0 0.0
        %682 = vmatpush2.msra.mxu0 0.0
        %683 = vmatprep.subr.mxu0 0.0
        %684 = vmatpush2.msra.mxu0 0.0
        %685 = vmatprep.subr.mxu0 0.0
        %686 = vmatpush2.msra.mxu0 0.0
        %687 = vmatprep.subr.mxu0 0.0
        %688 = vmatpush2.msra.mxu0 0.0
        %689 = vmatprep.subr.mxu0 0.0
        %690 = vmatpush2.msra.mxu0 0.0
        %691 = vmatprep.subr.mxu0 0.0
        %692 = vmatpush2.msra.mxu0 0.0
        %693 = vmatprep.mubr.f32.mxu0 0.0
        %694 = vmatmul.mubr.f32.gmra.mxu0 %v627
        %v695 = vpop.f32.mrf.mxu0
        %v696 = vadd.f32 %v623, %v695
        %v697 = vpop.f32.mrf.mxu0
        %698 = vdwg.mxu0
        %v699 = vmul.f32 %v696, 0.35355338
        %v700 = vld [vmem:[%s522] sm:$0xff]
        %v701 = vld [vmem:[#allocation11] sm:$0xff]
        %v702 = vld [vmem:[#allocation11 + $0x8] sm:$0xff]
        %v703 = vld [vmem:[#allocation11 + $0x10] sm:$0xff]
        %v704 = vld [vmem:[#allocation11 + $0x18] sm:$0xff]
        %v705 = vld [vmem:[%s7] sm:$0x1]
        %v707 = vlaneseq
        %v708 = vshrl.u32 %v707, 7
        %v709 = vsub.s32 0, %v708
        %v710 = vrot.slane %v705, %v709
        %v713 = vsel %vm625, %v700, 0
        %715 = vmatprep.subr.mxu0 0.0
        %716 = vmatpush1.msra.mxu0 0.0
        %717 = vmatprep.subr.mxu0 0.0
        %718 = vmatpush1.msra.mxu0 0.0
        %719 = vmatprep.subr.mxu0 0.0
        %720 = vmatpush1.msra.mxu0 0.0
        %721 = vmatprep.subr.mxu0 0.0
        %722 = vmatpush1.msra.mxu0 0.0
        %723 = vmatprep.subr.mxu0 0.0
        %724 = vmatpush1.msra.mxu0 0.0
        %725 = vmatprep.subr.mxu0 0.0
        %726 = vmatpush1.msra.mxu0 0.0
        %727 = vmatprep.subr.mxu0 0.0
        %728 = vmatpush1.msra.mxu0 0.0
        %729 = vmatprep.subr.mxu0 0.0
        %730 = vmatpush1.msra.mxu0 0.0
        %731 = vmatprep.subr.mxu0 0.0
        %732 = vmatpush1.msra.mxu0 0.0
        %733 = vmatprep.subr.mxu0 0.0
        %734 = vmatpush1.msra.mxu0 0.0
        %735 = vmatprep.subr.mxu0 0.0
        %736 = vmatpush1.msra.mxu0 0.0
        %737 = vmatprep.subr.mxu0 0.0
        %738 = vmatpush1.msra.mxu0 0.0
        %739 = vmatprep.subr.mxu0 0.0
        %740 = vmatpush1.msra.mxu0 %v704
        %741 = vmatprep.subr.mxu0 0.0
        %742 = vmatpush1.msra.mxu0 %v703
        %743 = vmatprep.subr.mxu0 0.0
        %744 = vmatpush1.msra.mxu0 %v702
        %745 = vmatprep.subr.mxu0 0.0
        %746 = vmatpush1.msra.mxu0 %v701
        %747 = vmatprep.subr.mxu0 0.0
        %748 = vmatpush2.msra.mxu0 0.0
        %749 = vmatprep.subr.mxu0 0.0
        %750 = vmatpush2.msra.mxu0 0.0
        %751 = vmatprep.subr.mxu0 0.0
        %752 = vmatpush2.msra.mxu0 0.0
        %753 = vmatprep.subr.mxu0 0.0
        %754 = vmatpush2.msra.mxu0 0.0
        %755 = vmatprep.subr.mxu0 0.0
        %756 = vmatpush2.msra.mxu0 0.0
        %757 = vmatprep.subr.mxu0 0.0
        %758 = vmatpush2.msra.mxu0 0.0
        %759 = vmatprep.subr.mxu0 0.0
        %760 = vmatpush2.msra.mxu0 0.0
        %761 = vmatprep.subr.mxu0 0.0
        %762 = vmatpush2.msra.mxu0 0.0
        %763 = vmatprep.subr.mxu0 0.0
        %764 = vmatpush2.msra.mxu0 0.0
        %765 = vmatprep.subr.mxu0 0.0
        %766 = vmatpush2.msra.mxu0 0.0
        %767 = vmatprep.subr.mxu0 0.0
        %768 = vmatpush2.msra.mxu0 0.0
        %769 = vmatprep.subr.mxu0 0.0
        %770 = vmatpush2.msra.mxu0 0.0
        %771 = vmatprep.subr.mxu0 0.0
        %772 = vmatpush2.msra.mxu0 0.0
        %773 = vmatprep.subr.mxu0 0.0
        %774 = vmatpush2.msra.mxu0 0.0
        %775 = vmatprep.subr.mxu0 0.0
        %776 = vmatpush2.msra.mxu0 0.0
        %777 = vmatprep.subr.mxu0 0.0
        %778 = vmatpush2.msra.mxu0 0.0
        %779 = vmatprep.mubr.f32.mxu0 0.0
        %780 = vmatmul.mubr.f32.gmra.mxu0 %v713
        %v781 = vpop.f32.mrf.mxu0
        %v782 = vadd.f32 %v710, %v781
        %v783 = vpop.f32.mrf.mxu0
        %784 = vdwg.mxu0
        %v785 = vld [vmem:[%s531] sm:$0xff]
        %v786 = vld [vmem:[#allocation12] sm:$0xff]
        %v787 = vld [vmem:[#allocation12 + $0x8] sm:$0xff]
        %v788 = vld [vmem:[#allocation12 + $0x10] sm:$0xff]
        %v789 = vld [vmem:[#allocation12 + $0x18] sm:$0xff]
        %v790 = vld [vmem:[%s9] sm:$0x1]
        %v792 = vlaneseq
        %v793 = vshrl.u32 %v792, 7
        %v794 = vsub.s32 0, %v793
        %v795 = vrot.slane %v790, %v794
        %v798 = vsel %vm625, %v785, 0
        %800 = vmatprep.subr.mxu0 0.0
        %801 = vmatpush1.msra.mxu0 0.0
        %802 = vmatprep.subr.mxu0 0.0
        %803 = vmatpush1.msra.mxu0 0.0
        %804 = vmatprep.subr.mxu0 0.0
        %805 = vmatpush1.msra.mxu0 0.0
        %806 = vmatprep.subr.mxu0 0.0
        %807 = vmatpush1.msra.mxu0 0.0
        %808 = vmatprep.subr.mxu0 0.0
        %809 = vmatpush1.msra.mxu0 0.0
        %810 = vmatprep.subr.mxu0 0.0
        %811 = vmatpush1.msra.mxu0 0.0
        %812 = vmatprep.subr.mxu0 0.0
        %813 = vmatpush1.msra.mxu0 0.0
        %814 = vmatprep.subr.mxu0 0.0
        %815 = vmatpush1.msra.mxu0 0.0
        %816 = vmatprep.subr.mxu0 0.0
        %817 = vmatpush1.msra.mxu0 0.0
        %818 = vmatprep.subr.mxu0 0.0
        %819 = vmatpush1.msra.mxu0 0.0
        %820 = vmatprep.subr.mxu0 0.0
        %821 = vmatpush1.msra.mxu0 0.0
        %822 = vmatprep.subr.mxu0 0.0
        %823 = vmatpush1.msra.mxu0 0.0
        %824 = vmatprep.subr.mxu0 0.0
        %825 = vmatpush1.msra.mxu0 %v789
        %826 = vmatprep.subr.mxu0 0.0
        %827 = vmatpush1.msra.mxu0 %v788
        %828 = vmatprep.subr.mxu0 0.0
        %829 = vmatpush1.msra.mxu0 %v787
        %830 = vmatprep.subr.mxu0 0.0
        %831 = vmatpush1.msra.mxu0 %v786
        %832 = vmatprep.subr.mxu0 0.0
        %833 = vmatpush2.msra.mxu0 0.0
        %834 = vmatprep.subr.mxu0 0.0
        %835 = vmatpush2.msra.mxu0 0.0
        %836 = vmatprep.subr.mxu0 0.0
        %837 = vmatpush2.msra.mxu0 0.0
        %838 = vmatprep.subr.mxu0 0.0
        %839 = vmatpush2.msra.mxu0 0.0
        %840 = vmatprep.subr.mxu0 0.0
        %841 = vmatpush2.msra.mxu0 0.0
        %842 = vmatprep.subr.mxu0 0.0
        %843 = vmatpush2.msra.mxu0 0.0
        %844 = vmatprep.subr.mxu0 0.0
        %845 = vmatpush2.msra.mxu0 0.0
        %846 = vmatprep.subr.mxu0 0.0
        %847 = vmatpush2.msra.mxu0 0.0
        %848 = vmatprep.subr.mxu0 0.0
        %849 = vmatpush2.msra.mxu0 0.0
        %850 = vmatprep.subr.mxu0 0.0
        %851 = vmatpush2.msra.mxu0 0.0
        %852 = vmatprep.subr.mxu0 0.0
        %853 = vmatpush2.msra.mxu0 0.0
        %854 = vmatprep.subr.mxu0 0.0
        %855 = vmatpush2.msra.mxu0 0.0
        %856 = vmatprep.subr.mxu0 0.0
        %857 = vmatpush2.msra.mxu0 0.0
        %858 = vmatprep.subr.mxu0 0.0
        %859 = vmatpush2.msra.mxu0 0.0
        %860 = vmatprep.subr.mxu0 0.0
        %861 = vmatpush2.msra.mxu0 0.0
        %862 = vmatprep.subr.mxu0 0.0
        %863 = vmatpush2.msra.mxu0 0.0
        %864 = vmatprep.mubr.f32.mxu0 0.0
        %865 = vmatmul.mubr.f32.gmra.mxu0 %v798
        %v866 = vpop.f32.mrf.mxu0
        %v867 = vadd.f32 %v795, %v866
        %v868 = vpop.f32.mrf.mxu0
        %869 = vdwg.mxu0
        %v870 = vld [vmem:[%s612] sm:$0x3]
        %v871 = vunpack.c.0.s8 %v870
        %v872 = vcvt.s32.f32 %v871
        %v873 = vmul.f32 %v872, -1e+30
        %vm874 = vcmask 64512
        %v876 = vsel %vm874, %v699, 0
        %v879 = vsel %vm874, %v782, 0
        %881 = vmatprep.subr.mxu0 0.0
        %882 = vmatpush1.xpose.msra.mxu0 0.0
        %883 = vmatprep.subr.mxu0 0.0
        %884 = vmatpush1.xpose.msra.mxu0 0.0
        %885 = vmatprep.subr.mxu0 0.0
        %886 = vmatpush1.xpose.msra.mxu0 0.0
        %887 = vmatprep.subr.mxu0 0.0
        %888 = vmatpush1.xpose.msra.mxu0 0.0
        %889 = vmatprep.subr.mxu0 0.0
        %890 = vmatpush1.xpose.msra.mxu0 0.0
        %891 = vmatprep.subr.mxu0 0.0
        %892 = vmatpush1.xpose.msra.mxu0 0.0
        %893 = vmatprep.subr.mxu0 0.0
        %894 = vmatpush1.xpose.msra.mxu0 0.0
        %895 = vmatprep.subr.mxu0 0.0
        %896 = vmatpush1.xpose.msra.mxu0 0.0
        %897 = vmatprep.subr.mxu0 0.0
        %898 = vmatpush1.xpose.msra.mxu0 0.0
        %899 = vmatprep.subr.mxu0 0.0
        %900 = vmatpush1.xpose.msra.mxu0 0.0
        %901 = vmatprep.subr.mxu0 0.0
        %902 = vmatpush1.xpose.msra.mxu0 0.0
        %903 = vmatprep.subr.mxu0 0.0
        %904 = vmatpush1.xpose.msra.mxu0 0.0
        %905 = vmatprep.subr.mxu0 0.0
        %906 = vmatpush1.xpose.msra.mxu0 0.0
        %907 = vmatprep.subr.mxu0 0.0
        %908 = vmatpush1.xpose.msra.mxu0 0.0
        %909 = vmatprep.subr.mxu0 0.0
        %910 = vmatpush1.xpose.msra.mxu0 0.0
        %911 = vmatprep.subr.mxu0 0.0
        %912 = vmatpush1.xpose.msra.mxu0 %v879
        %913 = vmatprep.subr.mxu0 0.0
        %914 = vmatpush2.xpose.msra.mxu0 0.0
        %915 = vmatprep.subr.mxu0 0.0
        %916 = vmatpush2.xpose.msra.mxu0 0.0
        %917 = vmatprep.subr.mxu0 0.0
        %918 = vmatpush2.xpose.msra.mxu0 0.0
        %919 = vmatprep.subr.mxu0 0.0
        %920 = vmatpush2.xpose.msra.mxu0 0.0
        %921 = vmatprep.subr.mxu0 0.0
        %922 = vmatpush2.xpose.msra.mxu0 0.0
        %923 = vmatprep.subr.mxu0 0.0
        %924 = vmatpush2.xpose.msra.mxu0 0.0
        %925 = vmatprep.subr.mxu0 0.0
        %926 = vmatpush2.xpose.msra.mxu0 0.0
        %927 = vmatprep.subr.mxu0 0.0
        %928 = vmatpush2.xpose.msra.mxu0 0.0
        %929 = vmatprep.subr.mxu0 0.0
        %930 = vmatpush2.xpose.msra.mxu0 0.0
        %931 = vmatprep.subr.mxu0 0.0
        %932 = vmatpush2.xpose.msra.mxu0 0.0
        %933 = vmatprep.subr.mxu0 0.0
        %934 = vmatpush2.xpose.msra.mxu0 0.0
        %935 = vmatprep.subr.mxu0 0.0
        %936 = vmatpush2.xpose.msra.mxu0 0.0
        %937 = vmatprep.subr.mxu0 0.0
        %938 = vmatpush2.xpose.msra.mxu0 0.0
        %939 = vmatprep.subr.mxu0 0.0
        %940 = vmatpush2.xpose.msra.mxu0 0.0
        %941 = vmatprep.subr.mxu0 0.0
        %942 = vmatpush2.xpose.msra.mxu0 0.0
        %943 = vmatprep.subr.mxu0 0.0
        %944 = vmatpush2.xpose.msra.mxu0 0.0
        %945 = vmatprep.mubr.f32.mxu0 0.0
        %946 = vmatmul.mubr.f32.gmra.mxu0 %v876
        %v947 = vpop.f32.mrf.mxu0
        %v948 = vadd.f32 %v873, %v947
        %v949 = vpop.f32.mrf.mxu0
        %950 = vdwg.mxu0
        %v951 = vsel %vm874, %v948, -inf
        %952 = vmax.xlane.f32.xlu0 %v951
        %v953 = vpop.xlane.xlu0 %952
        %v954 = vsub.f32 %v948, %v953
        %v955 = vmul.f32 %v954, 1.442695
        %v956 = vpow.pop %v955
        %v957 = vsel %vm874, %v956, 0.0
        %958 = vadd.xlane.f32.xlu0 %v957
        %v959 = vpop.xlane.xlu0 %958
        %v960 = vrcp.pop %v959
        %v961 = vmul.f32 %v956, %v960
        %962 = vst.msk [vmem:[%s608] sm:$0xff] %vm874, %v961
        %v964 = vsel %vm874, %v961, 0
        %966 = vmatprep.subr.mxu0 0.0
        %967 = vmatpush1.msra.mxu0 0.0
        %968 = vmatprep.subr.mxu0 0.0
        %969 = vmatpush1.msra.mxu0 0.0
        %970 = vmatprep.subr.mxu0 0.0
        %971 = vmatpush1.msra.mxu0 0.0
        %972 = vmatprep.subr.mxu0 0.0
        %973 = vmatpush1.msra.mxu0 0.0
        %974 = vmatprep.subr.mxu0 0.0
        %975 = vmatpush1.msra.mxu0 0.0
        %976 = vmatprep.subr.mxu0 0.0
        %977 = vmatpush1.msra.mxu0 0.0
        %978 = vmatprep.subr.mxu0 0.0
        %979 = vmatpush1.msra.mxu0 0.0
        %980 = vmatprep.subr.mxu0 0.0
        %981 = vmatpush1.msra.mxu0 0.0
        %982 = vmatprep.subr.mxu0 0.0
        %983 = vmatpush1.msra.mxu0 0.0
        %984 = vmatprep.subr.mxu0 0.0
        %985 = vmatpush1.msra.mxu0 0.0
        %986 = vmatprep.subr.mxu0 0.0
        %987 = vmatpush1.msra.mxu0 0.0
        %988 = vmatprep.subr.mxu0 0.0
        %989 = vmatpush1.msra.mxu0 0.0
        %990 = vmatprep.subr.mxu0 0.0
        %991 = vmatpush1.msra.mxu0 0.0
        %992 = vmatprep.subr.mxu0 0.0
        %993 = vmatpush1.msra.mxu0 0.0
        %994 = vmatprep.subr.mxu0 0.0
        %995 = vmatpush1.msra.mxu0 0.0
        %996 = vmatprep.subr.mxu0 0.0
        %997 = vmatpush1.msra.mxu0 %v867
        %998 = vmatprep.subr.mxu0 0.0
        %999 = vmatpush2.msra.mxu0 0.0
        %1000 = vmatprep.subr.mxu0 0.0
        %1001 = vmatpush2.msra.mxu0 0.0
        %1002 = vmatprep.subr.mxu0 0.0
        %1003 = vmatpush2.msra.mxu0 0.0
        %1004 = vmatprep.subr.mxu0 0.0
        %1005 = vmatpush2.msra.mxu0 0.0
        %1006 = vmatprep.subr.mxu0 0.0
        %1007 = vmatpush2.msra.mxu0 0.0
        %1008 = vmatprep.subr.mxu0 0.0
        %1009 = vmatpush2.msra.mxu0 0.0
        %1010 = vmatprep.subr.mxu0 0.0
        %1011 = vmatpush2.msra.mxu0 0.0
        %1012 = vmatprep.subr.mxu0 0.0
        %1013 = vmatpush2.msra.mxu0 0.0
        %1014 = vmatprep.subr.mxu0 0.0
        %1015 = vmatpush2.msra.mxu0 0.0
        %1016 = vmatprep.subr.mxu0 0.0
        %1017 = vmatpush2.msra.mxu0 0.0
        %1018 = vmatprep.subr.mxu0 0.0
        %1019 = vmatpush2.msra.mxu0 0.0
        %1020 = vmatprep.subr.mxu0 0.0
        %1021 = vmatpush2.msra.mxu0 0.0
        %1022 = vmatprep.subr.mxu0 0.0
        %1023 = vmatpush2.msra.mxu0 0.0
        %1024 = vmatprep.subr.mxu0 0.0
        %1025 = vmatpush2.msra.mxu0 0.0
        %1026 = vmatprep.subr.mxu0 0.0
        %1027 = vmatpush2.msra.mxu0 0.0
        %1028 = vmatprep.subr.mxu0 0.0
        %1029 = vmatpush2.msra.mxu0 0.0
        %1030 = vmatprep.mubr.f32.mxu0 0.0
        %1031 = vmatmul.mubr.f32.gmra.mxu0 %v964
        %v1032 = vpop.f32.mrf.mxu0
        %v1033 = vadd.f32 0.0, %v1032
        %v1034 = vpop.f32.mrf.mxu0
        %1035 = vdwg.mxu0
        %1036 = vst.msk [vmem:[#allocation2] sm:$0xff] %vm874, %v1033
        %1037 = vrot.lane.b32.xlu0 %v699, 120
        %v1038 = vpop.permute.xlu0 %1037
        %1039 = vrot.lane.b32.xlu0 %v782, 120
        %v1040 = vpop.permute.xlu0 %1039
        %v1041 = vsel %vm874, %v1038, 0
        %v1043 = vsel %vm874, %v1040, 0
        %1045 = vmatprep.subr.mxu0 0.0
        %1046 = vmatpush1.xpose.msra.mxu0 0.0
        %1047 = vmatprep.subr.mxu0 0.0
        %1048 = vmatpush1.xpose.msra.mxu0 0.0
        %1049 = vmatprep.subr.mxu0 0.0
        %1050 = vmatpush1.xpose.msra.mxu0 0.0
        %1051 = vmatprep.subr.mxu0 0.0
        %1052 = vmatpush1.xpose.msra.mxu0 0.0
        %1053 = vmatprep.subr.mxu0 0.0
        %1054 = vmatpush1.xpose.msra.mxu0 0.0
        %1055 = vmatprep.subr.mxu0 0.0
        %1056 = vmatpush1.xpose.msra.mxu0 0.0
        %1057 = vmatprep.subr.mxu0 0.0
        %1058 = vmatpush1.xpose.msra.mxu0 0.0
        %1059 = vmatprep.subr.mxu0 0.0
        %1060 = vmatpush1.xpose.msra.mxu0 0.0
        %1061 = vmatprep.subr.mxu0 0.0
        %1062 = vmatpush1.xpose.msra.mxu0 0.0
        %1063 = vmatprep.subr.mxu0 0.0
        %1064 = vmatpush1.xpose.msra.mxu0 0.0
        %1065 = vmatprep.subr.mxu0 0.0
        %1066 = vmatpush1.xpose.msra.mxu0 0.0
        %1067 = vmatprep.subr.mxu0 0.0
        %1068 = vmatpush1.xpose.msra.mxu0 0.0
        %1069 = vmatprep.subr.mxu0 0.0
        %1070 = vmatpush1.xpose.msra.mxu0 0.0
        %1071 = vmatprep.subr.mxu0 0.0
        %1072 = vmatpush1.xpose.msra.mxu0 0.0
        %1073 = vmatprep.subr.mxu0 0.0
        %1074 = vmatpush1.xpose.msra.mxu0 0.0
        %1075 = vmatprep.subr.mxu0 0.0
        %1076 = vmatpush1.xpose.msra.mxu0 %v1043
        %1077 = vmatprep.subr.mxu0 0.0
        %1078 = vmatpush2.xpose.msra.mxu0 0.0
        %1079 = vmatprep.subr.mxu0 0.0
        %1080 = vmatpush2.xpose.msra.mxu0 0.0
        %1081 = vmatprep.subr.mxu0 0.0
        %1082 = vmatpush2.xpose.msra.mxu0 0.0
        %1083 = vmatprep.subr.mxu0 0.0
        %1084 = vmatpush2.xpose.msra.mxu0 0.0
        %1085 = vmatprep.subr.mxu0 0.0
        %1086 = vmatpush2.xpose.msra.mxu0 0.0
        %1087 = vmatprep.subr.mxu0 0.0
        %1088 = vmatpush2.xpose.msra.mxu0 0.0
        %1089 = vmatprep.subr.mxu0 0.0
        %1090 = vmatpush2.xpose.msra.mxu0 0.0
        %1091 = vmatprep.subr.mxu0 0.0
        %1092 = vmatpush2.xpose.msra.mxu0 0.0
        %1093 = vmatprep.subr.mxu0 0.0
        %1094 = vmatpush2.xpose.msra.mxu0 0.0
        %1095 = vmatprep.subr.mxu0 0.0
        %1096 = vmatpush2.xpose.msra.mxu0 0.0
        %1097 = vmatprep.subr.mxu0 0.0
        %1098 = vmatpush2.xpose.msra.mxu0 0.0
        %1099 = vmatprep.subr.mxu0 0.0
        %1100 = vmatpush2.xpose.msra.mxu0 0.0
        %1101 = vmatprep.subr.mxu0 0.0
        %1102 = vmatpush2.xpose.msra.mxu0 0.0
        %1103 = vmatprep.subr.mxu0 0.0
        %1104 = vmatpush2.xpose.msra.mxu0 0.0
        %1105 = vmatprep.subr.mxu0 0.0
        %1106 = vmatpush2.xpose.msra.mxu0 0.0
        %1107 = vmatprep.subr.mxu0 0.0
        %1108 = vmatpush2.xpose.msra.mxu0 0.0
        %1109 = vmatprep.mubr.f32.mxu0 0.0
        %1110 = vmatmul.mubr.f32.gmra.mxu0 %v1041
        %v1111 = vpop.f32.mrf.mxu0
        %v1112 = vadd.f32 %v873, %v1111
        %v1113 = vpop.f32.mrf.mxu0
        %1114 = vdwg.mxu0
        %v1115 = vsel %vm874, %v1112, -inf
        %1116 = vmax.xlane.f32.xlu0 %v1115
        %v1117 = vpop.xlane.xlu0 %1116
        %v1118 = vsub.f32 %v1112, %v1117
        %v1119 = vmul.f32 %v1118, 1.442695
        %v1120 = vpow.pop %v1119
        %v1121 = vsel %vm874, %v1120, 0.0
        %1122 = vadd.xlane.f32.xlu0 %v1121
        %v1123 = vpop.xlane.xlu0 %1122
        %v1124 = vrcp.pop %v1123
        %v1125 = vmul.f32 %v1120, %v1124
        %s1126 = scalar_lea.vmem %s608, 8 [#allocation16]
        %1127 = vst.msk [vmem:[%s1126] sm:$0xff] %vm874, %v1125
        %1129 = vrot.lane.b32.xlu0 %v867, 120
        %v1130 = vpop.permute.xlu0 %1129
        %v1133 = vsel %vm874, %v1125, 0
        %1135 = vmatprep.subr.mxu0 0.0
        %1136 = vmatpush1.msra.mxu0 0.0
        %1137 = vmatprep.subr.mxu0 0.0
        %1138 = vmatpush1.msra.mxu0 0.0
        %1139 = vmatprep.subr.mxu0 0.0
        %1140 = vmatpush1.msra.mxu0 0.0
        %1141 = vmatprep.subr.mxu0 0.0
        %1142 = vmatpush1.msra.mxu0 0.0
        %1143 = vmatprep.subr.mxu0 0.0
        %1144 = vmatpush1.msra.mxu0 0.0
        %1145 = vmatprep.subr.mxu0 0.0
        %1146 = vmatpush1.msra.mxu0 0.0
        %1147 = vmatprep.subr.mxu0 0.0
        %1148 = vmatpush1.msra.mxu0 0.0
        %1149 = vmatprep.subr.mxu0 0.0
        %1150 = vmatpush1.msra.mxu0 0.0
        %1151 = vmatprep.subr.mxu0 0.0
        %1152 = vmatpush1.msra.mxu0 0.0
        %1153 = vmatprep.subr.mxu0 0.0
        %1154 = vmatpush1.msra.mxu0 0.0
        %1155 = vmatprep.subr.mxu0 0.0
        %1156 = vmatpush1.msra.mxu0 0.0
        %1157 = vmatprep.subr.mxu0 0.0
        %1158 = vmatpush1.msra.mxu0 0.0
        %1159 = vmatprep.subr.mxu0 0.0
        %1160 = vmatpush1.msra.mxu0 0.0
        %1161 = vmatprep.subr.mxu0 0.0
        %1162 = vmatpush1.msra.mxu0 0.0
        %1163 = vmatprep.subr.mxu0 0.0
        %1164 = vmatpush1.msra.mxu0 0.0
        %1165 = vmatprep.subr.mxu0 0.0
        %1166 = vmatpush1.msra.mxu0 %v1130
        %1167 = vmatprep.subr.mxu0 0.0
        %1168 = vmatpush2.msra.mxu0 0.0
        %1169 = vmatprep.subr.mxu0 0.0
        %1170 = vmatpush2.msra.mxu0 0.0
        %1171 = vmatprep.subr.mxu0 0.0
        %1172 = vmatpush2.msra.mxu0 0.0
        %1173 = vmatprep.subr.mxu0 0.0
        %1174 = vmatpush2.msra.mxu0 0.0
        %1175 = vmatprep.subr.mxu0 0.0
        %1176 = vmatpush2.msra.mxu0 0.0
        %1177 = vmatprep.subr.mxu0 0.0
        %1178 = vmatpush2.msra.mxu0 0.0
        %1179 = vmatprep.subr.mxu0 0.0
        %1180 = vmatpush2.msra.mxu0 0.0
        %1181 = vmatprep.subr.mxu0 0.0
        %1182 = vmatpush2.msra.mxu0 0.0
        %1183 = vmatprep.subr.mxu0 0.0
        %1184 = vmatpush2.msra.mxu0 0.0
        %1185 = vmatprep.subr.mxu0 0.0
        %1186 = vmatpush2.msra.mxu0 0.0
        %1187 = vmatprep.subr.mxu0 0.0
        %1188 = vmatpush2.msra.mxu0 0.0
        %1189 = vmatprep.subr.mxu0 0.0
        %1190 = vmatpush2.msra.mxu0 0.0
        %1191 = vmatprep.subr.mxu0 0.0
        %1192 = vmatpush2.msra.mxu0 0.0
        %1193 = vmatprep.subr.mxu0 0.0
        %1194 = vmatpush2.msra.mxu0 0.0
        %1195 = vmatprep.subr.mxu0 0.0
        %1196 = vmatpush2.msra.mxu0 0.0
        %1197 = vmatprep.subr.mxu0 0.0
        %1198 = vmatpush2.msra.mxu0 0.0
        %1199 = vmatprep.mubr.f32.mxu0 0.0
        %1200 = vmatmul.mubr.f32.gmra.mxu0 %v1133
        %v1201 = vpop.f32.mrf.mxu0
        %v1202 = vadd.f32 0.0, %v1201
        %v1203 = vpop.f32.mrf.mxu0
        %1204 = vdwg.mxu0
        %1206 = vrot.lane.b32.xlu0 %v1202, 8
        %v1207 = vpop.permute.xlu0 %1206
        %vm1209 = vcmask 130112
        %1210 = vst.msk [vmem:[#allocation2] sm:$0xff] %vm1209, %v1207
        %1211 = vrot.lane.b32.xlu0 %v699, 112
        %v1212 = vpop.permute.xlu0 %1211
        %1213 = vrot.lane.b32.xlu0 %v782, 112
        %v1214 = vpop.permute.xlu0 %1213
        %v1215 = vsel %vm874, %v1212, 0
        %v1217 = vsel %vm874, %v1214, 0
        %1219 = vmatprep.subr.mxu0 0.0
        %1220 = vmatpush1.xpose.msra.mxu0 0.0
        %1221 = vmatprep.subr.mxu0 0.0
        %1222 = vmatpush1.xpose.msra.mxu0 0.0
        %1223 = vmatprep.subr.mxu0 0.0
        %1224 = vmatpush1.xpose.msra.mxu0 0.0
        %1225 = vmatprep.subr.mxu0 0.0
        %1226 = vmatpush1.xpose.msra.mxu0 0.0
        %1227 = vmatprep.subr.mxu0 0.0
        %1228 = vmatpush1.xpose.msra.mxu0 0.0
        %1229 = vmatprep.subr.mxu0 0.0
        %1230 = vmatpush1.xpose.msra.mxu0 0.0
        %1231 = vmatprep.subr.mxu0 0.0
        %1232 = vmatpush1.xpose.msra.mxu0 0.0
        %1233 = vmatprep.subr.mxu0 0.0
        %1234 = vmatpush1.xpose.msra.mxu0 0.0
        %1235 = vmatprep.subr.mxu0 0.0
        %1236 = vmatpush1.xpose.msra.mxu0 0.0
        %1237 = vmatprep.subr.mxu0 0.0
        %1238 = vmatpush1.xpose.msra.mxu0 0.0
        %1239 = vmatprep.subr.mxu0 0.0
        %1240 = vmatpush1.xpose.msra.mxu0 0.0
        %1241 = vmatprep.subr.mxu0 0.0
        %1242 = vmatpush1.xpose.msra.mxu0 0.0
        %1243 = vmatprep.subr.mxu0 0.0
        %1244 = vmatpush1.xpose.msra.mxu0 0.0
        %1245 = vmatprep.subr.mxu0 0.0
        %1246 = vmatpush1.xpose.msra.mxu0 0.0
        %1247 = vmatprep.subr.mxu0 0.0
        %1248 = vmatpush1.xpose.msra.mxu0 0.0
        %1249 = vmatprep.subr.mxu0 0.0
        %1250 = vmatpush1.xpose.msra.mxu0 %v1217
        %1251 = vmatprep.subr.mxu0 0.0
        %1252 = vmatpush2.xpose.msra.mxu0 0.0
        %1253 = vmatprep.subr.mxu0 0.0
        %1254 = vmatpush2.xpose.msra.mxu0 0.0
        %1255 = vmatprep.subr.mxu0 0.0
        %1256 = vmatpush2.xpose.msra.mxu0 0.0
        %1257 = vmatprep.subr.mxu0 0.0
        %1258 = vmatpush2.xpose.msra.mxu0 0.0
        %1259 = vmatprep.subr.mxu0 0.0
        %1260 = vmatpush2.xpose.msra.mxu0 0.0
        %1261 = vmatprep.subr.mxu0 0.0
        %1262 = vmatpush2.xpose.msra.mxu0 0.0
        %1263 = vmatprep.subr.mxu0 0.0
        %1264 = vmatpush2.xpose.msra.mxu0 0.0
        %1265 = vmatprep.subr.mxu0 0.0
        %1266 = vmatpush2.xpose.msra.mxu0 0.0
        %1267 = vmatprep.subr.mxu0 0.0
        %1268 = vmatpush2.xpose.msra.mxu0 0.0
        %1269 = vmatprep.subr.mxu0 0.0
        %1270 = vmatpush2.xpose.msra.mxu0 0.0
        %1271 = vmatprep.subr.mxu0 0.0
        %1272 = vmatpush2.xpose.msra.mxu0 0.0
        %1273 = vmatprep.subr.mxu0 0.0
        %1274 = vmatpush2.xpose.msra.mxu0 0.0
        %1275 = vmatprep.subr.mxu0 0.0
        %1276 = vmatpush2.xpose.msra.mxu0 0.0
        %1277 = vmatprep.subr.mxu0 0.0
        %1278 = vmatpush2.xpose.msra.mxu0 0.0
        %1279 = vmatprep.subr.mxu0 0.0
        %1280 = vmatpush2.xpose.msra.mxu0 0.0
        %1281 = vmatprep.subr.mxu0 0.0
        %1282 = vmatpush2.xpose.msra.mxu0 0.0
        %1283 = vmatprep.mubr.f32.mxu0 0.0
        %1284 = vmatmul.mubr.f32.gmra.mxu0 %v1215
        %v1285 = vpop.f32.mrf.mxu0
        %v1286 = vadd.f32 %v873, %v1285
        %v1287 = vpop.f32.mrf.mxu0
        %1288 = vdwg.mxu0
        %v1289 = vsel %vm874, %v1286, -inf
        %1290 = vmax.xlane.f32.xlu0 %v1289
        %v1291 = vpop.xlane.xlu0 %1290
        %v1292 = vsub.f32 %v1286, %v1291
        %v1293 = vmul.f32 %v1292, 1.442695
        %v1294 = vpow.pop %v1293
        %v1295 = vsel %vm874, %v1294, 0.0
        %1296 = vadd.xlane.f32.xlu0 %v1295
        %v1297 = vpop.xlane.xlu0 %1296
        %v1298 = vrcp.pop %v1297
        %v1299 = vmul.f32 %v1294, %v1298
        %s1300 = scalar_lea.vmem %s608, 16 [#allocation16]
        %1301 = vst.msk [vmem:[%s1300] sm:$0xff] %vm874, %v1299
        %1302 = vrot.lane.b32.xlu0 %v867, 112
        %v1303 = vpop.permute.xlu0 %1302
        %v1306 = vsel %vm874, %v1299, 0
        %1308 = vmatprep.subr.mxu0 0.0
        %1309 = vmatpush1.msra.mxu0 0.0
        %1310 = vmatprep.subr.mxu0 0.0
        %1311 = vmatpush1.msra.mxu0 0.0
        %1312 = vmatprep.subr.mxu0 0.0
        %1313 = vmatpush1.msra.mxu0 0.0
        %1314 = vmatprep.subr.mxu0 0.0
        %1315 = vmatpush1.msra.mxu0 0.0
        %1316 = vmatprep.subr.mxu0 0.0
        %1317 = vmatpush1.msra.mxu0 0.0
        %1318 = vmatprep.subr.mxu0 0.0
        %1319 = vmatpush1.msra.mxu0 0.0
        %1320 = vmatprep.subr.mxu0 0.0
        %1321 = vmatpush1.msra.mxu0 0.0
        %1322 = vmatprep.subr.mxu0 0.0
        %1323 = vmatpush1.msra.mxu0 0.0
        %1324 = vmatprep.subr.mxu0 0.0
        %1325 = vmatpush1.msra.mxu0 0.0
        %1326 = vmatprep.subr.mxu0 0.0
        %1327 = vmatpush1.msra.mxu0 0.0
        %1328 = vmatprep.subr.mxu0 0.0
        %1329 = vmatpush1.msra.mxu0 0.0
        %1330 = vmatprep.subr.mxu0 0.0
        %1331 = vmatpush1.msra.mxu0 0.0
        %1332 = vmatprep.subr.mxu0 0.0
        %1333 = vmatpush1.msra.mxu0 0.0
        %1334 = vmatprep.subr.mxu0 0.0
        %1335 = vmatpush1.msra.mxu0 0.0
        %1336 = vmatprep.subr.mxu0 0.0
        %1337 = vmatpush1.msra.mxu0 0.0
        %1338 = vmatprep.subr.mxu0 0.0
        %1339 = vmatpush1.msra.mxu0 %v1303
        %1340 = vmatprep.subr.mxu0 0.0
        %1341 = vmatpush2.msra.mxu0 0.0
        %1342 = vmatprep.subr.mxu0 0.0
        %1343 = vmatpush2.msra.mxu0 0.0
        %1344 = vmatprep.subr.mxu0 0.0
        %1345 = vmatpush2.msra.mxu0 0.0
        %1346 = vmatprep.subr.mxu0 0.0
        %1347 = vmatpush2.msra.mxu0 0.0
        %1348 = vmatprep.subr.mxu0 0.0
        %1349 = vmatpush2.msra.mxu0 0.0
        %1350 = vmatprep.subr.mxu0 0.0
        %1351 = vmatpush2.msra.mxu0 0.0
        %1352 = vmatprep.subr.mxu0 0.0
        %1353 = vmatpush2.msra.mxu0 0.0
        %1354 = vmatprep.subr.mxu0 0.0
        %1355 = vmatpush2.msra.mxu0 0.0
        %1356 = vmatprep.subr.mxu0 0.0
        %1357 = vmatpush2.msra.mxu0 0.0
        %1358 = vmatprep.subr.mxu0 0.0
        %1359 = vmatpush2.msra.mxu0 0.0
        %1360 = vmatprep.subr.mxu0 0.0
        %1361 = vmatpush2.msra.mxu0 0.0
        %1362 = vmatprep.subr.mxu0 0.0
        %1363 = vmatpush2.msra.mxu0 0.0
        %1364 = vmatprep.subr.mxu0 0.0
        %1365 = vmatpush2.msra.mxu0 0.0
        %1366 = vmatprep.subr.mxu0 0.0
        %1367 = vmatpush2.msra.mxu0 0.0
        %1368 = vmatprep.subr.mxu0 0.0
        %1369 = vmatpush2.msra.mxu0 0.0
        %1370 = vmatprep.subr.mxu0 0.0
        %1371 = vmatpush2.msra.mxu0 0.0
        %1372 = vmatprep.mubr.f32.mxu0 0.0
        %1373 = vmatmul.mubr.f32.gmra.mxu0 %v1306
        %v1374 = vpop.f32.mrf.mxu0
        %v1375 = vadd.f32 0.0, %v1374
        %v1376 = vpop.f32.mrf.mxu0
        %1377 = vdwg.mxu0
        %1379 = vrot.lane.b32.xlu0 %v1375, 16
        %v1380 = vpop.permute.xlu0 %1379
        %vm1382 = vcmask 195712
        %1383 = vst.msk [vmem:[#allocation2] sm:$0xff] %vm1382, %v1380
        %1384 = vrot.lane.b32.xlu0 %v699, 104
        %v1385 = vpop.permute.xlu0 %1384
        %1386 = vrot.lane.b32.xlu0 %v782, 104
        %v1387 = vpop.permute.xlu0 %1386
        %v1388 = vsel %vm874, %v1385, 0
        %v1390 = vsel %vm874, %v1387, 0
        %1392 = vmatprep.subr.mxu0 0.0
        %1393 = vmatpush1.xpose.msra.mxu0 0.0
        %1394 = vmatprep.subr.mxu0 0.0
        %1395 = vmatpush1.xpose.msra.mxu0 0.0
        %1396 = vmatprep.subr.mxu0 0.0
        %1397 = vmatpush1.xpose.msra.mxu0 0.0
        %1398 = vmatprep.subr.mxu0 0.0
        %1399 = vmatpush1.xpose.msra.mxu0 0.0
        %1400 = vmatprep.subr.mxu0 0.0
        %1401 = vmatpush1.xpose.msra.mxu0 0.0
        %1402 = vmatprep.subr.mxu0 0.0
        %1403 = vmatpush1.xpose.msra.mxu0 0.0
        %1404 = vmatprep.subr.mxu0 0.0
        %1405 = vmatpush1.xpose.msra.mxu0 0.0
        %1406 = vmatprep.subr.mxu0 0.0
        %1407 = vmatpush1.xpose.msra.mxu0 0.0
        %1408 = vmatprep.subr.mxu0 0.0
        %1409 = vmatpush1.xpose.msra.mxu0 0.0
        %1410 = vmatprep.subr.mxu0 0.0
        %1411 = vmatpush1.xpose.msra.mxu0 0.0
        %1412 = vmatprep.subr.mxu0 0.0
        %1413 = vmatpush1.xpose.msra.mxu0 0.0
        %1414 = vmatprep.subr.mxu0 0.0
        %1415 = vmatpush1.xpose.msra.mxu0 0.0
        %1416 = vmatprep.subr.mxu0 0.0
        %1417 = vmatpush1.xpose.msra.mxu0 0.0
        %1418 = vmatprep.subr.mxu0 0.0
        %1419 = vmatpush1.xpose.msra.mxu0 0.0
        %1420 = vmatprep.subr.mxu0 0.0
        %1421 = vmatpush1.xpose.msra.mxu0 0.0
        %1422 = vmatprep.subr.mxu0 0.0
        %1423 = vmatpush1.xpose.msra.mxu0 %v1390
        %1424 = vmatprep.subr.mxu0 0.0
        %1425 = vmatpush2.xpose.msra.mxu0 0.0
        %1426 = vmatprep.subr.mxu0 0.0
        %1427 = vmatpush2.xpose.msra.mxu0 0.0
        %1428 = vmatprep.subr.mxu0 0.0
        %1429 = vmatpush2.xpose.msra.mxu0 0.0
        %1430 = vmatprep.subr.mxu0 0.0
        %1431 = vmatpush2.xpose.msra.mxu0 0.0
        %1432 = vmatprep.subr.mxu0 0.0
        %1433 = vmatpush2.xpose.msra.mxu0 0.0
        %1434 = vmatprep.subr.mxu0 0.0
        %1435 = vmatpush2.xpose.msra.mxu0 0.0
        %1436 = vmatprep.subr.mxu0 0.0
        %1437 = vmatpush2.xpose.msra.mxu0 0.0
        %1438 = vmatprep.subr.mxu0 0.0
        %1439 = vmatpush2.xpose.msra.mxu0 0.0
        %1440 = vmatprep.subr.mxu0 0.0
        %1441 = vmatpush2.xpose.msra.mxu0 0.0
        %1442 = vmatprep.subr.mxu0 0.0
        %1443 = vmatpush2.xpose.msra.mxu0 0.0
        %1444 = vmatprep.subr.mxu0 0.0
        %1445 = vmatpush2.xpose.msra.mxu0 0.0
        %1446 = vmatprep.subr.mxu0 0.0
        %1447 = vmatpush2.xpose.msra.mxu0 0.0
        %1448 = vmatprep.subr.mxu0 0.0
        %1449 = vmatpush2.xpose.msra.mxu0 0.0
        %1450 = vmatprep.subr.mxu0 0.0
        %1451 = vmatpush2.xpose.msra.mxu0 0.0
        %1452 = vmatprep.subr.mxu0 0.0
        %1453 = vmatpush2.xpose.msra.mxu0 0.0
        %1454 = vmatprep.subr.mxu0 0.0
        %1455 = vmatpush2.xpose.msra.mxu0 0.0
        %1456 = vmatprep.mubr.f32.mxu0 0.0
        %1457 = vmatmul.mubr.f32.gmra.mxu0 %v1388
        %v1458 = vpop.f32.mrf.mxu0
        %v1459 = vadd.f32 %v873, %v1458
        %v1460 = vpop.f32.mrf.mxu0
        %1461 = vdwg.mxu0
        %v1462 = vsel %vm874, %v1459, -inf
        %1463 = vmax.xlane.f32.xlu0 %v1462
        %v1464 = vpop.xlane.xlu0 %1463
        %v1465 = vsub.f32 %v1459, %v1464
        %v1466 = vmul.f32 %v1465, 1.442695
        %v1467 = vpow.pop %v1466
        %v1468 = vsel %vm874, %v1467, 0.0
        %1469 = vadd.xlane.f32.xlu0 %v1468
        %v1470 = vpop.xlane.xlu0 %1469
        %v1471 = vrcp.pop %v1470
        %v1472 = vmul.f32 %v1467, %v1471
        %s1473 = scalar_lea.vmem %s608, 24 [#allocation16]
        %1474 = vst.msk [vmem:[%s1473] sm:$0xff] %vm874, %v1472
        %1475 = vrot.lane.b32.xlu0 %v867, 104
        %v1476 = vpop.permute.xlu0 %1475
        %v1479 = vsel %vm874, %v1472, 0
        %1481 = vmatprep.subr.mxu0 0.0
        %1482 = vmatpush1.msra.mxu0 0.0
        %1483 = vmatprep.subr.mxu0 0.0
        %1484 = vmatpush1.msra.mxu0 0.0
        %1485 = vmatprep.subr.mxu0 0.0
        %1486 = vmatpush1.msra.mxu0 0.0
        %1487 = vmatprep.subr.mxu0 0.0
        %1488 = vmatpush1.msra.mxu0 0.0
        %1489 = vmatprep.subr.mxu0 0.0
        %1490 = vmatpush1.msra.mxu0 0.0
        %1491 = vmatprep.subr.mxu0 0.0
        %1492 = vmatpush1.msra.mxu0 0.0
        %1493 = vmatprep.subr.mxu0 0.0
        %1494 = vmatpush1.msra.mxu0 0.0
        %1495 = vmatprep.subr.mxu0 0.0
        %1496 = vmatpush1.msra.mxu0 0.0
        %1497 = vmatprep.subr.mxu0 0.0
        %1498 = vmatpush1.msra.mxu0 0.0
        %1499 = vmatprep.subr.mxu0 0.0
        %1500 = vmatpush1.msra.mxu0 0.0
        %1501 = vmatprep.subr.mxu0 0.0
        %1502 = vmatpush1.msra.mxu0 0.0
        %1503 = vmatprep.subr.mxu0 0.0
        %1504 = vmatpush1.msra.mxu0 0.0
        %1505 = vmatprep.subr.mxu0 0.0
        %1506 = vmatpush1.msra.mxu0 0.0
        %1507 = vmatprep.subr.mxu0 0.0
        %1508 = vmatpush1.msra.mxu0 0.0
        %1509 = vmatprep.subr.mxu0 0.0
        %1510 = vmatpush1.msra.mxu0 0.0
        %1511 = vmatprep.subr.mxu0 0.0
        %1512 = vmatpush1.msra.mxu0 %v1476
        %1513 = vmatprep.subr.mxu0 0.0
        %1514 = vmatpush2.msra.mxu0 0.0
        %1515 = vmatprep.subr.mxu0 0.0
        %1516 = vmatpush2.msra.mxu0 0.0
        %1517 = vmatprep.subr.mxu0 0.0
        %1518 = vmatpush2.msra.mxu0 0.0
        %1519 = vmatprep.subr.mxu0 0.0
        %1520 = vmatpush2.msra.mxu0 0.0
        %1521 = vmatprep.subr.mxu0 0.0
        %1522 = vmatpush2.msra.mxu0 0.0
        %1523 = vmatprep.subr.mxu0 0.0
        %1524 = vmatpush2.msra.mxu0 0.0
        %1525 = vmatprep.subr.mxu0 0.0
        %1526 = vmatpush2.msra.mxu0 0.0
        %1527 = vmatprep.subr.mxu0 0.0
        %1528 = vmatpush2.msra.mxu0 0.0
        %1529 = vmatprep.subr.mxu0 0.0
        %1530 = vmatpush2.msra.mxu0 0.0
        %1531 = vmatprep.subr.mxu0 0.0
        %1532 = vmatpush2.msra.mxu0 0.0
        %1533 = vmatprep.subr.mxu0 0.0
        %1534 = vmatpush2.msra.mxu0 0.0
        %1535 = vmatprep.subr.mxu0 0.0
        %1536 = vmatpush2.msra.mxu0 0.0
        %1537 = vmatprep.subr.mxu0 0.0
        %1538 = vmatpush2.msra.mxu0 0.0
        %1539 = vmatprep.subr.mxu0 0.0
        %1540 = vmatpush2.msra.mxu0 0.0
        %1541 = vmatprep.subr.mxu0 0.0
        %1542 = vmatpush2.msra.mxu0 0.0
        %1543 = vmatprep.subr.mxu0 0.0
        %1544 = vmatpush2.msra.mxu0 0.0
        %1545 = vmatprep.mubr.f32.mxu0 0.0
        %1546 = vmatmul.mubr.f32.gmra.mxu0 %v1479
        %v1547 = vpop.f32.mrf.mxu0
        %v1548 = vadd.f32 0.0, %v1547
        %v1549 = vpop.f32.mrf.mxu0
        %1550 = vdwg.mxu0
        %1552 = vrot.lane.b32.xlu0 %v1548, 24
        %v1553 = vpop.permute.xlu0 %1552
        %vm1555 = vcmask 261312
        %1556 = vst.msk [vmem:[#allocation2] sm:$0xff] %vm1555, %v1553
        %v1557 = vld [vmem:[#allocation2] sm:$0xff]
        %v1558 = vld [vmem:[#allocation14] sm:$0xff]
        %v1559 = vld [vmem:[#allocation14 + $0x8] sm:$0xff]
        %v1560 = vld [vmem:[#allocation14 + $0x10] sm:$0xff]
        %v1561 = vld [vmem:[#allocation14 + $0x18] sm:$0xff]
        %v1562 = vld [vmem:[%s11] sm:$0x1]
        %v1564 = vlaneseq
        %v1565 = vshrl.u32 %v1564, 7
        %v1566 = vsub.s32 0, %v1565
        %v1567 = vrot.slane %v1562, %v1566
        %v1570 = vsel %vm625, %v1557, 0
        %1572 = vmatprep.subr.mxu0 0.0
        %1573 = vmatpush1.msra.mxu0 0.0
        %1574 = vmatprep.subr.mxu0 0.0
        %1575 = vmatpush1.msra.mxu0 0.0
        %1576 = vmatprep.subr.mxu0 0.0
        %1577 = vmatpush1.msra.mxu0 0.0
        %1578 = vmatprep.subr.mxu0 0.0
        %1579 = vmatpush1.msra.mxu0 0.0
        %1580 = vmatprep.subr.mxu0 0.0
        %1581 = vmatpush1.msra.mxu0 0.0
        %1582 = vmatprep.subr.mxu0 0.0
        %1583 = vmatpush1.msra.mxu0 0.0
        %1584 = vmatprep.subr.mxu0 0.0
        %1585 = vmatpush1.msra.mxu0 0.0
        %1586 = vmatprep.subr.mxu0 0.0
        %1587 = vmatpush1.msra.mxu0 0.0
        %1588 = vmatprep.subr.mxu0 0.0
        %1589 = vmatpush1.msra.mxu0 0.0
        %1590 = vmatprep.subr.mxu0 0.0
        %1591 = vmatpush1.msra.mxu0 0.0
        %1592 = vmatprep.subr.mxu0 0.0
        %1593 = vmatpush1.msra.mxu0 0.0
        %1594 = vmatprep.subr.mxu0 0.0
        %1595 = vmatpush1.msra.mxu0 0.0
        %1596 = vmatprep.subr.mxu0 0.0
        %1597 = vmatpush1.msra.mxu0 %v1561
        %1598 = vmatprep.subr.mxu0 0.0
        %1599 = vmatpush1.msra.mxu0 %v1560
        %1600 = vmatprep.subr.mxu0 0.0
        %1601 = vmatpush1.msra.mxu0 %v1559
        %1602 = vmatprep.subr.mxu0 0.0
        %1603 = vmatpush1.msra.mxu0 %v1558
        %1604 = vmatprep.subr.mxu0 0.0
        %1605 = vmatpush2.msra.mxu0 0.0
        %1606 = vmatprep.subr.mxu0 0.0
        %1607 = vmatpush2.msra.mxu0 0.0
        %1608 = vmatprep.subr.mxu0 0.0
        %1609 = vmatpush2.msra.mxu0 0.0
        %1610 = vmatprep.subr.mxu0 0.0
        %1611 = vmatpush2.msra.mxu0 0.0
        %1612 = vmatprep.subr.mxu0 0.0
        %1613 = vmatpush2.msra.mxu0 0.0
        %1614 = vmatprep.subr.mxu0 0.0
        %1615 = vmatpush2.msra.mxu0 0.0
        %1616 = vmatprep.subr.mxu0 0.0
        %1617 = vmatpush2.msra.mxu0 0.0
        %1618 = vmatprep.subr.mxu0 0.0
        %1619 = vmatpush2.msra.mxu0 0.0
        %1620 = vmatprep.subr.mxu0 0.0
        %1621 = vmatpush2.msra.mxu0 0.0
        %1622 = vmatprep.subr.mxu0 0.0
        %1623 = vmatpush2.msra.mxu0 0.0
        %1624 = vmatprep.subr.mxu0 0.0
        %1625 = vmatpush2.msra.mxu0 0.0
        %1626 = vmatprep.subr.mxu0 0.0
        %1627 = vmatpush2.msra.mxu0 0.0
        %1628 = vmatprep.subr.mxu0 0.0
        %1629 = vmatpush2.msra.mxu0 0.0
        %1630 = vmatprep.subr.mxu0 0.0
        %1631 = vmatpush2.msra.mxu0 0.0
        %1632 = vmatprep.subr.mxu0 0.0
        %1633 = vmatpush2.msra.mxu0 0.0
        %1634 = vmatprep.subr.mxu0 0.0
        %1635 = vmatpush2.msra.mxu0 0.0
        %1636 = vmatprep.mubr.f32.mxu0 0.0
        %1637 = vmatmul.mubr.f32.gmra.mxu0 %v1570
        %v1638 = vpop.f32.mrf.mxu0
        %v1639 = vadd.f32 %v1567, %v1638
        %v1640 = vpop.f32.mrf.mxu0
        %1641 = vdwg.mxu0
        %1642 = vst.msk [vmem:[%s601] sm:$0xff] %vm625, %v1639
        %s1643 = sand.u32 %s319, 1
        %s1644 = scalar_lea.sflag [#allocation5], %s1643
        %s1645 = sand.u32 %s319, 1
        %s1646 = smul.addr %s1645, 8
        %s1647 = scalar_lea.vmem [#allocation15], %s1646
        %s1648 = sand.u32 %s345, 1
        %s1649 = scalar_lea.sflag [#allocation17], %s1648
        %s1650 = sand.u32 %s345, 1
        %s1651 = smul.addr %s1650, 32
        %s1652 = scalar_lea.vmem [#allocation16], %s1651
        // Predicated region
        $region97: #{tpu_custom_call.1} parent=67 // pred_check
          %p1653 = pneg %p329
        $region98: #{tpu_custom_call.1} parent=67 // pred_check_branch
          %1655 = sbr.rel (%p1653) target = $region100
        $region99: #{tpu_custom_call.1} parent=67 // pred_region
          %s1657 = ssub.s32 128, 128
          %1658 = vsyncadd %s1644, %s1657
          %s1659 = smul.addr %s39, 128
          %s1660 = scalar_lea.hbm %s12, %s1659
          %s1662 = sshll.u32 %s1647, 4
          %s1663 = int_to_ptr.vmem [resolvable:$true] %s1662
          %1665 = dma.vmem_to_hbm [thread:$0]  %s1663, 128, %s1660, %s1644
        $region100: #{tpu_custom_call.1} parent=67 // pred_fallthru
          _
        // Predicated region
        $region101: #{tpu_custom_call.1} parent=67 // pred_check
          %p1666 = pneg %p355
        $region102: #{tpu_custom_call.1} parent=67 // pred_check_branch
          %1668 = sbr.rel (%p1666) target = $region104
        $region103: #{tpu_custom_call.1} parent=67 // pred_region
          %s1670 = ssub.s32 512, 512
          %1671 = vsyncadd %s1649, %s1670
          %s1672 = smul.addr %s39, 4
          %s1673 = smul.addr %s1672, 128
          %s1674 = scalar_lea.hbm %s13, %s1673
          %s1675 = sshll.u32 %s1652, 4
          %s1676 = int_to_ptr.vmem [resolvable:$true] %s1675
          %1681 = dma.vmem_to_hbm [thread:$0]  %s1676, 512, %s1674, %s1649, 128, 128, 8
        $region104: #{tpu_custom_call.1} parent=67 // pred_fallthru
          _
      $region68: #{tpu_custom_call.1} parent=5 // pred_fallthru
        _
      %p1682 = scmp.le.s32.totalorder 2, %s34
      // Predicated region
      $region105: #{tpu_custom_call.1} parent=5 // pred_check
        %p1683 = pneg %p1682
      $region106: #{tpu_custom_call.1} parent=5 // pred_check_branch
        %1685 = sbr.rel (%p1683) target = $region108
      $region107: #{tpu_custom_call.1} parent=5 // pred_region
        %s1686 = ssub.s32 %s34, 2
        // Predicated region
        $region109: #{tpu_custom_call.1} parent=107 // pred_check
          %p1687 = pneg %p335
        $region110: #{tpu_custom_call.1} parent=107 // pred_check_branch
          %1689 = sbr.rel (%p1687) target = $region112
        $region111: #{tpu_custom_call.1} parent=107 // pred_region
          %s1690 = sand.u32 %s320, 1
          %s1691 = scalar_lea.sflag [#allocation5], %s1690
          %s1692 = sand.u32 %s320, 1
          %s1693 = smul.addr %s1692, 8
          %s1694 = scalar_lea.vmem [#allocation15], %s1693
          %1695 = dma.done %s1691, 128
        $region112: #{tpu_custom_call.1} parent=107 // pred_fallthru
          _
        // Predicated region
        $region113: #{tpu_custom_call.1} parent=107 // pred_check
          %p1696 = pneg %p361
        $region114: #{tpu_custom_call.1} parent=107 // pred_check_branch
          %1698 = sbr.rel (%p1696) target = $region116
        $region115: #{tpu_custom_call.1} parent=107 // pred_region
          %s1699 = sand.u32 %s346, 1
          %s1700 = scalar_lea.sflag [#allocation17], %s1699
          %s1701 = sand.u32 %s346, 1
          %s1702 = smul.addr %s1701, 32
          %s1703 = scalar_lea.vmem [#allocation16], %s1702
          %1704 = dma.done %s1700, 512
        $region116: #{tpu_custom_call.1} parent=107 // pred_fallthru
          _
      $region108: #{tpu_custom_call.1} parent=5 // pred_fallthru
        _
    $region6: #{tpu_custom_call.1} parent=1 // loop_footer
      %s38 = sadd.s32 1, %s34
    $region7: #{tpu_custom_call.1} parent=1 // loop_footer_branch
      %33 = sbr.rel target = $region3
    $region8: #{tpu_custom_call.1} parent=1 // loop_exit
      _
    %1705 = vsyncpa [#allocation4], 1
    %s1706 = scalar_lea.sflag [#allocation4], 1
    %1707 = vsyncpa %s1706, 1
    %1708 = vsyncpa [#allocation7], 1
    %s1709 = scalar_lea.sflag [#allocation7], 1
    %1710 = vsyncpa %s1709, 1
    %1711 = vsyncpa [#allocation10], 1
    %1712 = vsyncpa [#allocation13], 1
    %1713 = vsyncpa [#allocation5], 1
    %s1714 = scalar_lea.sflag [#allocation5], 1
    %1715 = vsyncpa %s1714, 1
    %1716 = vsyncpa [#allocation17], 1
    %s1717 = scalar_lea.sflag [#allocation17], 1
    %1718 = vsyncpa %s1717, 1

</llo_original>
